<compile_context>
chip_gen: v6e
topology: v6e:2x2x1
jax: 0.10.0
libtpu: 0.0.40
codegen_flags: <defaults>
</compile_context>

<pallas_src>
import jax
import jax.numpy as jnp
from jax.experimental import pallas as pl
from jax.experimental.pallas import tpu as pltpu


def _round_up(x, m):
    return ((x + m - 1) // m) * m


# ---------------------------------------------------------------------------
# Fused Pallas kernel: conv1 + conv2 + flatten + Linear->ReLU->Linear
# ---------------------------------------------------------------------------

def _critic_fused_kernel(p_ref, w1_ref, b1_ref, w2_ref, b2_ref,
                         w3_ref, b3_ref, w4_ref, b4_ref, o_ref):
    """All weights resident in VMEM; p_ref is one batch-tile of patches.

    p_ref : [9, TILE_B, 192]  conv1 patches; leading dim = conv2 tap r,
                              lane = 48*q + f with q the conv2 output position
    w1    : [192, 128]        block-diag conv1 weight (block q: rows 48q..48q+44
                              -> cols 32q..32q+31)
    w2    : [9, 128, 128]     per-tap conv2 weight, 32x32 block repeated 4x on
                              the diagonal (keeps the 4 q-groups independent)
    w3    : [128, Hp]         lin1 weight with the NCHW flatten permutation
                              folded in (row = 32*q + c); all 128 K rows real
    w4    : [Hp, Np]          lin2 weight (output padded to 128 lanes)
    biases are f32 row vectors (channel-tiled x4 for b1/b2); o_ref [TILE_B, Np] f32.
    """
    f32 = jnp.float32
    cdt = w1_ref.dtype                      # matmul operand dtype (bf16 or f32)
    tile_b = o_ref.shape[0]

    w1 = w1_ref[...]
    # Hoist the bias broadcast out of the tap loop (broadcast_in_dim is not CSE'd).
    b1 = jnp.broadcast_to(b1_ref[...], (tile_b, 128))
    b2 = b2_ref[...]
    b3 = b3_ref[...]
    b4 = b4_ref[...]

    acc2 = jnp.zeros((tile_b, 128), f32)    # conv2 accumulator, all 4 q's in lanes
    for r in range(9):                      # conv2 kernel tap (fully unrolled)
        # conv1 for all 4 conv2-output positions at once (block-diag weight)
        h1 = jnp.dot(p_ref[r], w1, preferred_element_type=f32) + b1
        h1 = jnp.maximum(h1, 0.0)
        # conv2 tap r contribution (block-diag weight keeps q-groups separate)
        acc2 = acc2 + jnp.dot(h1.astype(cdt), w2_ref[r],
                              preferred_element_type=f32)
    h2 = jnp.maximum(acc2 + b2, 0.0)        # [TILE_B, 128] == flattened conv features
    # NCHW flatten is folded into w3's row ordering -> single dense matmul.
    h = jnp.dot(h2.astype(cdt), w3_ref[...], preferred_element_type=f32) + b3
    h = jnp.maximum(h, 0.0)
    o_ref[...] = jnp.dot(h.astype(cdt), w4_ref[...],
                         preferred_element_type=f32) + b4


# ---------------------------------------------------------------------------
# JAX-level glue: build the patch tensor (layout plumbing only, done in bf16)
# ---------------------------------------------------------------------------

def _build_patches(x):
    """x: [B, 13, 13, 5] -> P: [9, B, 192] (same dtype as x).

    P[r, b, 48*q + f] is the conv1 input feature f = kh1*15 + kw1*5 + c
    (padded 45 -> 48) of the conv1 window that feeds conv2 output position
    q = oh2*2 + ow2 through conv2 kernel tap r = kh2*3 + kw2.
    """
    B = x.shape[0]
    rows = []
    for kh2 in range(3):
        for kw2 in range(3):
            qcols = []
            for oh2 in range(2):
                for ow2 in range(2):
                    ih0 = 4 * oh2 + 2 * kh2
                    iw0 = 4 * ow2 + 2 * kw2
                    patch = x[:, ih0:ih0 + 3, iw0:iw0 + 3, :].reshape(B, 45)
                    qcols.append(jnp.pad(patch, ((0, 0), (0, 3))))  # 45 -> 48
            rows.append(jnp.concatenate(qcols, axis=1))             # [B, 192]
    return jnp.stack(rows, axis=0)                                   # [9, B, 192]
    # TODO(synk): for very large batches, build these patches fully in-kernel
    # from a per-tile copy of the raw view_state (manual DMA from an ANY-space
    # input) to remove the remaining ~2x input-side HBM amplification.


# ---------------------------------------------------------------------------
# Parameter init (kaiming_uniform_ weights, zero bias -- matches the module)
# ---------------------------------------------------------------------------

def kaiming_uniform(key, shape, fan_in):
    # torch.nn.init.kaiming_uniform_ defaults: bound = sqrt(6 / fan_in)
    bound = (6.0 / fan_in) ** 0.5
    return jax.random.uniform(key, shape, jnp.float32, -bound, bound)


def init_params(key, output_size=6, input_size=128, hidden_size=128,
                compute_dtype=jnp.bfloat16):
    assert input_size == 32 * 2 * 2, "conv stack emits 32*2*2 = 128 features"
    ks = jax.random.split(key, 4)
    # Canonical PyTorch-shaped float32 weights
    conv1_w = kaiming_uniform(ks[0], (32, 5, 3, 3), fan_in=5 * 3 * 3)    # [OC,IC,KH,KW]
    conv2_w = kaiming_uniform(ks[1], (32, 32, 3, 3), fan_in=32 * 3 * 3)
    lin1_w_t = kaiming_uniform(ks[2], (hidden_size, input_size), fan_in=input_size)   # [out,in]
    lin2_w_t = kaiming_uniform(ks[3], (output_size, hidden_size), fan_in=hidden_size)
    conv1_b = jnp.zeros((32,), jnp.float32)
    conv2_b = jnp.zeros((32,), jnp.float32)
    lin1_b = jnp.zeros((hidden_size,), jnp.float32)
    lin2_b = jnp.zeros((output_size,), jnp.float32)

    hidden_pad = _round_up(hidden_size, 128)
    n_out_pad = _round_up(output_size, 128)

    # conv1 core: (KH,KW,IC,OC) -> [45, 32]; block-diagonal over the 4 conv2
    # output positions q so that lane group 32q..32q+31 of h1 holds q's channels.
    w1c = jnp.transpose(conv1_w, (2, 3, 1, 0)).reshape(45, 32)
    w1 = jnp.zeros((192, 128), jnp.float32)
    for q in range(4):
        w1 = w1.at[48 * q:48 * q + 45, 32 * q:32 * q + 32].set(w1c)
    b1 = jnp.tile(conv1_b, 4).reshape(1, 128)

    # conv2 per tap r = kh2*3+kw2: [9, IC, OC]; same 32x32 block on the diagonal
    # of every q-group (conv weights do not depend on output position).
    w2c = jnp.transpose(conv2_w, (2, 3, 1, 0)).reshape(9, 32, 32)
    w2 = jnp.zeros((9, 128, 128), jnp.float32)
    for q in range(4):
        w2 = w2.at[:, 32 * q:32 * q + 32, 32 * q:32 * q + 32].set(w2c)
    b2 = jnp.tile(conv2_b, 4).reshape(1, 128)

    # lin1 with the NCHW flatten folded in: kernel lane (32*q + c) must hit the
    # PyTorch flatten index (c*4 + q).
    lin1_in = lin1_w_t.T                                     # [128, H], row = c*4 + q
    w3 = jnp.transpose(lin1_in.reshape(32, 4, hidden_size),
                       (1, 0, 2)).reshape(128, hidden_size)  # row = 32*q + c
    w3 = jnp.pad(w3, ((0, 0), (0, hidden_pad - hidden_size)))
    b3 = jnp.pad(lin1_b, (0, hidden_pad - hidden_size)).reshape(1, hidden_pad)

    # lin2: [H, out] padded to a lane-dense output
    w4 = jnp.pad(lin2_w_t.T,
                 ((0, hidden_pad - hidden_size), (0, n_out_pad - output_size)))
    b4 = jnp.pad(lin2_b, (0, n_out_pad - output_size)).reshape(1, n_out_pad)

    return dict(
        # canonical f32 weights (used by the pure-JAX reference)
        conv1_w=conv1_w, conv1_b=conv1_b,
        conv2_w=conv2_w, conv2_b=conv2_b,
        lin1_w=lin1_w_t.T, lin1_b=lin1_b,     # stored [in, out] for x @ w
        lin2_w=lin2_w_t.T, lin2_b=lin2_b,
        # fused-kernel weights (block-diag / flatten-folded); operands in compute_dtype
        k_w1=w1.astype(compute_dtype), k_b1=b1,
        k_w2=w2.astype(compute_dtype), k_b2=b2,
        k_w3=w3.astype(compute_dtype), k_b3=b3,
        k_w4=w4.astype(compute_dtype), k_b4=b4,
    )


# ---------------------------------------------------------------------------
# Critic forward (if_feature=False): single fused pallas_call
# ---------------------------------------------------------------------------

def critic_forward(params, view_state):
    B = view_state.shape[0]
    compute_dtype = params["k_w1"].dtype
    output_size = params["lin2_w"].shape[1]
    hidden_pad = params["k_w3"].shape[1]
    n_out_pad = params["k_w4"].shape[1]

    # Build the streamed patch tensor directly in compute dtype (one bf16 pass).
    p = _build_patches(view_state.astype(compute_dtype))        # [9, B, 192]

    # Batch tile: multiple of 16 (bf16 sublane packing), capped at 128, and
    # sized so the grid has >= 2 steps when B > 16 (megacore sharding on v7x,
    # input-DMA pipelining, less padding waste for awkward batch sizes).
    tile_b = min(128, _round_up(max(-(-B // 2), 1), 16))
    b_pad = _round_up(B, tile_b)
    if b_pad != B:
        p = jnp.pad(p, ((0, 0), (0, b_pad - B), (0, 0)))

    grid = (b_pad // tile_b,)
    out = pl.pallas_call(
        _critic_fused_kernel,
        out_shape=jax.ShapeDtypeStruct((b_pad, n_out_pad), jnp.float32),
        grid_spec=pltpu.PrefetchScalarGridSpec(
            num_scalar_prefetch=0,
            grid=grid,
            in_specs=[
                # streamed per batch-tile (could add pipeline_mode=pl.Buffered(3)
                # on v7x to deepen input buffering; VMEM headroom is ample)
                pl.BlockSpec((9, tile_b, 192), lambda i: (0, i, 0)),
                # weights / biases: constant index_map -> loaded once, pinned in VMEM
                pl.BlockSpec((192, 128), lambda i: (0, 0)),
                pl.BlockSpec((1, 128), lambda i: (0, 0)),
                pl.BlockSpec((9, 128, 128), lambda i: (0, 0, 0)),
                pl.BlockSpec((1, 128), lambda i: (0, 0)),
                pl.BlockSpec((128, hidden_pad), lambda i: (0, 0)),
                pl.BlockSpec((1, hidden_pad), lambda i: (0, 0)),
                pl.BlockSpec((hidden_pad, n_out_pad), lambda i: (0, 0)),
                pl.BlockSpec((1, n_out_pad), lambda i: (0, 0)),
            ],
            out_specs=pl.BlockSpec((tile_b, n_out_pad), lambda i: (i, 0)),
        ),
        compiler_params=pltpu.CompilerParams(
            dimension_semantics=("parallel",)),   # batch tiles shard across TCs (v7x)
    )(p, params["k_w1"], params["k_b1"], params["k_w2"], params["k_b2"],
      params["k_w3"], params["k_b3"], params["k_w4"], params["k_b4"])

    return out[:B, :output_size]


# ---------------------------------------------------------------------------
# Pure-JAX reference (correctness check only)
# ---------------------------------------------------------------------------

def critic_reference(params, view_state, matmul_dtype=jnp.float32):
    """Reference forward. With matmul_dtype=bfloat16 it mirrors the kernel's
    mixed precision (bf16 matmul operands, f32 accumulation & epilogues)."""
    f32 = jnp.float32
    prec = jax.lax.Precision.HIGHEST if matmul_dtype == f32 else None
    dn = ('NHWC', 'HWIO', 'NHWC')
    x = view_state.astype(matmul_dtype)

    w1 = jnp.transpose(params["conv1_w"], (2, 3, 1, 0)).astype(matmul_dtype)
    y = jax.lax.conv_general_dilated(x, w1, (2, 2), 'VALID', dimension_numbers=dn,
                                     precision=prec, preferred_element_type=f32)
    y = jnp.maximum(y + params["conv1_b"], 0.0)

    w2 = jnp.transpose(params["conv2_w"], (2, 3, 1, 0)).astype(matmul_dtype)
    y = jax.lax.conv_general_dilated(y.astype(matmul_dtype), w2, (2, 2), 'VALID',
                                     dimension_numbers=dn, precision=prec,
                                     preferred_element_type=f32)
    y = jnp.maximum(y + params["conv2_b"], 0.0)

    flat = jnp.transpose(y, (0, 3, 1, 2)).reshape(x.shape[0], -1)   # NCHW flatten
    h = jnp.dot(flat.astype(matmul_dtype), params["lin1_w"].astype(matmul_dtype),
                precision=prec, preferred_element_type=f32) + params["lin1_b"]
    h = jnp.maximum(h, 0.0)
    return jnp.dot(h.astype(matmul_dtype), params["lin2_w"].astype(matmul_dtype),
                   precision=prec, preferred_element_type=f32) + params["lin2_b"]


if __name__ == "__main__":
    key = jax.random.PRNGKey(0)
    k_param, k_x = jax.random.split(key)

    OUTPUT_SIZE = 6
    COMPUTE_DTYPE = jnp.bfloat16   # MXU-native on v5e/v6e/v7x; f32 accumulation
    params = init_params(k_param, output_size=OUTPUT_SIZE,
                         compute_dtype=COMPUTE_DTYPE)

    # view_state: [batch, 13, 13, 5] NHWC (13x13x5 so the conv stack emits the
    # default input_size=128 features expected by view_linear).
    view_state = jax.random.normal(k_x, (2, 13, 13, 5), dtype=jnp.float32)

    fwd = jax.jit(critic_forward)
    out = jax.block_until_ready(fwd(params, view_state))
    assert out.shape == (2, OUTPUT_SIZE)

    # Strict check against a reference using the same bf16-operand / f32-accumulate recipe.
    ref_matched = critic_reference(params, view_state, matmul_dtype=COMPUTE_DTYPE)
    assert jnp.allclose(out, ref_matched, atol=1e-2, rtol=1e-2), (out, ref_matched)

    # Loose sanity check against the full-float32 reference (documents bf16 drift).
    ref_f32 = critic_reference(params, view_state, matmul_dtype=jnp.float32)
    assert float(jnp.max(jnp.abs(out - ref_f32))) < 0.25, (out, ref_f32)

    print("KERNEL_OK")
</pallas_src>

<mosaic_0001>
module attributes {stable_mosaic.version = 11 : i64} {
  func.func @_critic_fused_kernel(%arg0: i32, %arg1: memref<9x16x192xbf16, #tpu.memory_space<vmem>>, %arg2: memref<192x128xbf16, #tpu.memory_space<vmem>>, %arg3: memref<1x128xf32, #tpu.memory_space<vmem>>, %arg4: memref<9x128x128xbf16, #tpu.memory_space<vmem>>, %arg5: memref<1x128xf32, #tpu.memory_space<vmem>>, %arg6: memref<128x128xbf16, #tpu.memory_space<vmem>>, %arg7: memref<1x128xf32, #tpu.memory_space<vmem>>, %arg8: memref<128x128xbf16, #tpu.memory_space<vmem>>, %arg9: memref<1x128xf32, #tpu.memory_space<vmem>>, %arg10: memref<16x128xf32, #tpu.memory_space<vmem>>) attributes {dimension_semantics = [#tpu.dimension_semantics<parallel>], iteration_bounds = array<i64: 1>, scalar_prefetch = 0 : i64, scratch_operands = 0 : i64, tpu.core_type = #tpu.core_type<tc>, window_params = [{transform_indices = @transform_0, window_bounds = array<i64: 9, 16, 192>}, {pipeline_mode = #tpu.pipeline_mode<synchronous>, transform_indices = @transform_1, window_bounds = array<i64: 192, 128>}, {pipeline_mode = #tpu.pipeline_mode<synchronous>, transform_indices = @transform_2, window_bounds = array<i64: 1, 128>}, {pipeline_mode = #tpu.pipeline_mode<synchronous>, transform_indices = @transform_3, window_bounds = array<i64: 9, 128, 128>}, {pipeline_mode = #tpu.pipeline_mode<synchronous>, transform_indices = @transform_4, window_bounds = array<i64: 1, 128>}, {pipeline_mode = #tpu.pipeline_mode<synchronous>, transform_indices = @transform_5, window_bounds = array<i64: 128, 128>}, {pipeline_mode = #tpu.pipeline_mode<synchronous>, transform_indices = @transform_6, window_bounds = array<i64: 1, 128>}, {pipeline_mode = #tpu.pipeline_mode<synchronous>, transform_indices = @transform_7, window_bounds = array<i64: 128, 128>}, {pipeline_mode = #tpu.pipeline_mode<synchronous>, transform_indices = @transform_8, window_bounds = array<i64: 1, 128>}, {transform_indices = @transform_9, window_bounds = array<i64: 16, 128>}]} {
    %c0 = arith.constant 0 : index
    %c0_0 = arith.constant 0 : index
    %0 = vector.load %arg2[%c0, %c0_0] : memref<192x128xbf16, #tpu.memory_space<vmem>>, vector<192x128xbf16>
    %c0_1 = arith.constant 0 : index
    %c0_2 = arith.constant 0 : index
    %1 = vector.load %arg3[%c0_1, %c0_2] : memref<1x128xf32, #tpu.memory_space<vmem>>, vector<1x128xf32>
    %2 = vector.shape_cast %1 : vector<1x128xf32> to vector<1x128xf32>
    %3 = vector.broadcast %2 : vector<1x128xf32> to vector<16x128xf32>
    %c0_3 = arith.constant 0 : index
    %c0_4 = arith.constant 0 : index
    %4 = vector.load %arg5[%c0_3, %c0_4] : memref<1x128xf32, #tpu.memory_space<vmem>>, vector<1x128xf32>
    %c0_5 = arith.constant 0 : index
    %c0_6 = arith.constant 0 : index
    %5 = vector.load %arg7[%c0_5, %c0_6] : memref<1x128xf32, #tpu.memory_space<vmem>>, vector<1x128xf32>
    %c0_7 = arith.constant 0 : index
    %c0_8 = arith.constant 0 : index
    %6 = vector.load %arg9[%c0_7, %c0_8] : memref<1x128xf32, #tpu.memory_space<vmem>>, vector<1x128xf32>
    %cst = arith.constant 0.000000e+00 : f32
    %7 = vector.broadcast %cst : f32 to vector<16x128xf32>
    %c0_9 = arith.constant 0 : index
    %c0_10 = arith.constant 0 : index
    %c0_11 = arith.constant 0 : index
    %8 = vector.load %arg1[%c0_9, %c0_10, %c0_11] : memref<9x16x192xbf16, #tpu.memory_space<vmem>>, vector<1x16x192xbf16>
    %9 = vector.shape_cast %8 : vector<1x16x192xbf16> to vector<16x192xbf16>
    %cst_12 = arith.constant dense<0.000000e+00> : vector<16x128xf32>
    %10 = tpu.matmul %9, %0, %cst_12 {dimension_numbers = #tpu.dot_dimension_numbers<[1], [0], [0], [1], [0, 0, 1, 1], [], []>} : vector<16x192xbf16>, vector<192x128xbf16>, vector<16x128xf32> -> vector<16x128xf32>
    %11 = arith.addf %10, %3 : vector<16x128xf32>
    %cst_13 = arith.constant 0.000000e+00 : f32
    %12 = vector.broadcast %cst_13 : f32 to vector<16x128xf32>
    %13 = arith.maximumf %11, %12 : vector<16x128xf32>
    %14 = arith.truncf %13 : vector<16x128xf32> to vector<16x128xbf16>
    %c0_14 = arith.constant 0 : index
    %c0_15 = arith.constant 0 : index
    %c0_16 = arith.constant 0 : index
    %15 = vector.load %arg4[%c0_14, %c0_15, %c0_16] : memref<9x128x128xbf16, #tpu.memory_space<vmem>>, vector<1x128x128xbf16>
    %16 = vector.shape_cast %15 : vector<1x128x128xbf16> to vector<128x128xbf16>
    %cst_17 = arith.constant dense<0.000000e+00> : vector<16x128xf32>
    %17 = tpu.matmul %14, %16, %cst_17 {dimension_numbers = #tpu.dot_dimension_numbers<[1], [0], [0], [1], [0, 0, 1, 1], [], []>} : vector<16x128xbf16>, vector<128x128xbf16>, vector<16x128xf32> -> vector<16x128xf32>
    %18 = arith.addf %7, %17 : vector<16x128xf32>
    %c1 = arith.constant 1 : index
    %c0_18 = arith.constant 0 : index
    %c0_19 = arith.constant 0 : index
    %19 = vector.load %arg1[%c1, %c0_18, %c0_19] : memref<9x16x192xbf16, #tpu.memory_space<vmem>>, vector<1x16x192xbf16>
    %20 = vector.shape_cast %19 : vector<1x16x192xbf16> to vector<16x192xbf16>
    %cst_20 = arith.constant dense<0.000000e+00> : vector<16x128xf32>
    %21 = tpu.matmul %20, %0, %cst_20 {dimension_numbers = #tpu.dot_dimension_numbers<[1], [0], [0], [1], [0, 0, 1, 1], [], []>} : vector<16x192xbf16>, vector<192x128xbf16>, vector<16x128xf32> -> vector<16x128xf32>
    %22 = arith.addf %21, %3 : vector<16x128xf32>
    %cst_21 = arith.constant 0.000000e+00 : f32
    %23 = vector.broadcast %cst_21 : f32 to vector<16x128xf32>
    %24 = arith.maximumf %22, %23 : vector<16x128xf32>
    %25 = arith.truncf %24 : vector<16x128xf32> to vector<16x128xbf16>
    %c1_22 = arith.constant 1 : index
    %c0_23 = arith.constant 0 : index
    %c0_24 = arith.constant 0 : index
    %26 = vector.load %arg4[%c1_22, %c0_23, %c0_24] : memref<9x128x128xbf16, #tpu.memory_space<vmem>>, vector<1x128x128xbf16>
    %27 = vector.shape_cast %26 : vector<1x128x128xbf16> to vector<128x128xbf16>
    %cst_25 = arith.constant dense<0.000000e+00> : vector<16x128xf32>
    %28 = tpu.matmul %25, %27, %cst_25 {dimension_numbers = #tpu.dot_dimension_numbers<[1], [0], [0], [1], [0, 0, 1, 1], [], []>} : vector<16x128xbf16>, vector<128x128xbf16>, vector<16x128xf32> -> vector<16x128xf32>
    %29 = arith.addf %18, %28 : vector<16x128xf32>
    %c2 = arith.constant 2 : index
    %c0_26 = arith.constant 0 : index
    %c0_27 = arith.constant 0 : index
    %30 = vector.load %arg1[%c2, %c0_26, %c0_27] : memref<9x16x192xbf16, #tpu.memory_space<vmem>>, vector<1x16x192xbf16>
    %31 = vector.shape_cast %30 : vector<1x16x192xbf16> to vector<16x192xbf16>
    %cst_28 = arith.constant dense<0.000000e+00> : vector<16x128xf32>
    %32 = tpu.matmul %31, %0, %cst_28 {dimension_numbers = #tpu.dot_dimension_numbers<[1], [0], [0], [1], [0, 0, 1, 1], [], []>} : vector<16x192xbf16>, vector<192x128xbf16>, vector<16x128xf32> -> vector<16x128xf32>
    %33 = arith.addf %32, %3 : vector<16x128xf32>
    %cst_29 = arith.constant 0.000000e+00 : f32
    %34 = vector.broadcast %cst_29 : f32 to vector<16x128xf32>
    %35 = arith.maximumf %33, %34 : vector<16x128xf32>
    %36 = arith.truncf %35 : vector<16x128xf32> to vector<16x128xbf16>
    %c2_30 = arith.constant 2 : index
    %c0_31 = arith.constant 0 : index
    %c0_32 = arith.constant 0 : index
    %37 = vector.load %arg4[%c2_30, %c0_31, %c0_32] : memref<9x128x128xbf16, #tpu.memory_space<vmem>>, vector<1x128x128xbf16>
    %38 = vector.shape_cast %37 : vector<1x128x128xbf16> to vector<128x128xbf16>
    %cst_33 = arith.constant dense<0.000000e+00> : vector<16x128xf32>
    %39 = tpu.matmul %36, %38, %cst_33 {dimension_numbers = #tpu.dot_dimension_numbers<[1], [0], [0], [1], [0, 0, 1, 1], [], []>} : vector<16x128xbf16>, vector<128x128xbf16>, vector<16x128xf32> -> vector<16x128xf32>
    %40 = arith.addf %29, %39 : vector<16x128xf32>
    %c3 = arith.constant 3 : index
    %c0_34 = arith.constant 0 : index
    %c0_35 = arith.constant 0 : index
    %41 = vector.load %arg1[%c3, %c0_34, %c0_35] : memref<9x16x192xbf16, #tpu.memory_space<vmem>>, vector<1x16x192xbf16>
    %42 = vector.shape_cast %41 : vector<1x16x192xbf16> to vector<16x192xbf16>
    %cst_36 = arith.constant dense<0.000000e+00> : vector<16x128xf32>
    %43 = tpu.matmul %42, %0, %cst_36 {dimension_numbers = #tpu.dot_dimension_numbers<[1], [0], [0], [1], [0, 0, 1, 1], [], []>} : vector<16x192xbf16>, vector<192x128xbf16>, vector<16x128xf32> -> vector<16x128xf32>
    %44 = arith.addf %43, %3 : vector<16x128xf32>
    %cst_37 = arith.constant 0.000000e+00 : f32
    %45 = vector.broadcast %cst_37 : f32 to vector<16x128xf32>
    %46 = arith.maximumf %44, %45 : vector<16x128xf32>
    %47 = arith.truncf %46 : vector<16x128xf32> to vector<16x128xbf16>
    %c3_38 = arith.constant 3 : index
    %c0_39 = arith.constant 0 : index
    %c0_40 = arith.constant 0 : index
    %48 = vector.load %arg4[%c3_38, %c0_39, %c0_40] : memref<9x128x128xbf16, #tpu.memory_space<vmem>>, vector<1x128x128xbf16>
    %49 = vector.shape_cast %48 : vector<1x128x128xbf16> to vector<128x128xbf16>
    %cst_41 = arith.constant dense<0.000000e+00> : vector<16x128xf32>
    %50 = tpu.matmul %47, %49, %cst_41 {dimension_numbers = #tpu.dot_dimension_numbers<[1], [0], [0], [1], [0, 0, 1, 1], [], []>} : vector<16x128xbf16>, vector<128x128xbf16>, vector<16x128xf32> -> vector<16x128xf32>
    %51 = arith.addf %40, %50 : vector<16x128xf32>
    %c4 = arith.constant 4 : index
    %c0_42 = arith.constant 0 : index
    %c0_43 = arith.constant 0 : index
    %52 = vector.load %arg1[%c4, %c0_42, %c0_43] : memref<9x16x192xbf16, #tpu.memory_space<vmem>>, vector<1x16x192xbf16>
    %53 = vector.shape_cast %52 : vector<1x16x192xbf16> to vector<16x192xbf16>
    %cst_44 = arith.constant dense<0.000000e+00> : vector<16x128xf32>
    %54 = tpu.matmul %53, %0, %cst_44 {dimension_numbers = #tpu.dot_dimension_numbers<[1], [0], [0], [1], [0, 0, 1, 1], [], []>} : vector<16x192xbf16>, vector<192x128xbf16>, vector<16x128xf32> -> vector<16x128xf32>
    %55 = arith.addf %54, %3 : vector<16x128xf32>
    %cst_45 = arith.constant 0.000000e+00 : f32
    %56 = vector.broadcast %cst_45 : f32 to vector<16x128xf32>
    %57 = arith.maximumf %55, %56 : vector<16x128xf32>
    %58 = arith.truncf %57 : vector<16x128xf32> to vector<16x128xbf16>
    %c4_46 = arith.constant 4 : index
    %c0_47 = arith.constant 0 : index
    %c0_48 = arith.constant 0 : index
    %59 = vector.load %arg4[%c4_46, %c0_47, %c0_48] : memref<9x128x128xbf16, #tpu.memory_space<vmem>>, vector<1x128x128xbf16>
    %60 = vector.shape_cast %59 : vector<1x128x128xbf16> to vector<128x128xbf16>
    %cst_49 = arith.constant dense<0.000000e+00> : vector<16x128xf32>
    %61 = tpu.matmul %58, %60, %cst_49 {dimension_numbers = #tpu.dot_dimension_numbers<[1], [0], [0], [1], [0, 0, 1, 1], [], []>} : vector<16x128xbf16>, vector<128x128xbf16>, vector<16x128xf32> -> vector<16x128xf32>
    %62 = arith.addf %51, %61 : vector<16x128xf32>
    %c5 = arith.constant 5 : index
    %c0_50 = arith.constant 0 : index
    %c0_51 = arith.constant 0 : index
    %63 = vector.load %arg1[%c5, %c0_50, %c0_51] : memref<9x16x192xbf16, #tpu.memory_space<vmem>>, vector<1x16x192xbf16>
    %64 = vector.shape_cast %63 : vector<1x16x192xbf16> to vector<16x192xbf16>
    %cst_52 = arith.constant dense<0.000000e+00> : vector<16x128xf32>
    %65 = tpu.matmul %64, %0, %cst_52 {dimension_numbers = #tpu.dot_dimension_numbers<[1], [0], [0], [1], [0, 0, 1, 1], [], []>} : vector<16x192xbf16>, vector<192x128xbf16>, vector<16x128xf32> -> vector<16x128xf32>
    %66 = arith.addf %65, %3 : vector<16x128xf32>
    %cst_53 = arith.constant 0.000000e+00 : f32
    %67 = vector.broadcast %cst_53 : f32 to vector<16x128xf32>
    %68 = arith.maximumf %66, %67 : vector<16x128xf32>
    %69 = arith.truncf %68 : vector<16x128xf32> to vector<16x128xbf16>
    %c5_54 = arith.constant 5 : index
    %c0_55 = arith.constant 0 : index
    %c0_56 = arith.constant 0 : index
    %70 = vector.load %arg4[%c5_54, %c0_55, %c0_56] : memref<9x128x128xbf16, #tpu.memory_space<vmem>>, vector<1x128x128xbf16>
    %71 = vector.shape_cast %70 : vector<1x128x128xbf16> to vector<128x128xbf16>
    %cst_57 = arith.constant dense<0.000000e+00> : vector<16x128xf32>
    %72 = tpu.matmul %69, %71, %cst_57 {dimension_numbers = #tpu.dot_dimension_numbers<[1], [0], [0], [1], [0, 0, 1, 1], [], []>} : vector<16x128xbf16>, vector<128x128xbf16>, vector<16x128xf32> -> vector<16x128xf32>
    %73 = arith.addf %62, %72 : vector<16x128xf32>
    %c6 = arith.constant 6 : index
    %c0_58 = arith.constant 0 : index
    %c0_59 = arith.constant 0 : index
    %74 = vector.load %arg1[%c6, %c0_58, %c0_59] : memref<9x16x192xbf16, #tpu.memory_space<vmem>>, vector<1x16x192xbf16>
    %75 = vector.shape_cast %74 : vector<1x16x192xbf16> to vector<16x192xbf16>
    %cst_60 = arith.constant dense<0.000000e+00> : vector<16x128xf32>
    %76 = tpu.matmul %75, %0, %cst_60 {dimension_numbers = #tpu.dot_dimension_numbers<[1], [0], [0], [1], [0, 0, 1, 1], [], []>} : vector<16x192xbf16>, vector<192x128xbf16>, vector<16x128xf32> -> vector<16x128xf32>
    %77 = arith.addf %76, %3 : vector<16x128xf32>
    %cst_61 = arith.constant 0.000000e+00 : f32
    %78 = vector.broadcast %cst_61 : f32 to vector<16x128xf32>
    %79 = arith.maximumf %77, %78 : vector<16x128xf32>
    %80 = arith.truncf %79 : vector<16x128xf32> to vector<16x128xbf16>
    %c6_62 = arith.constant 6 : index
    %c0_63 = arith.constant 0 : index
    %c0_64 = arith.constant 0 : index
    %81 = vector.load %arg4[%c6_62, %c0_63, %c0_64] : memref<9x128x128xbf16, #tpu.memory_space<vmem>>, vector<1x128x128xbf16>
    %82 = vector.shape_cast %81 : vector<1x128x128xbf16> to vector<128x128xbf16>
    %cst_65 = arith.constant dense<0.000000e+00> : vector<16x128xf32>
    %83 = tpu.matmul %80, %82, %cst_65 {dimension_numbers = #tpu.dot_dimension_numbers<[1], [0], [0], [1], [0, 0, 1, 1], [], []>} : vector<16x128xbf16>, vector<128x128xbf16>, vector<16x128xf32> -> vector<16x128xf32>
    %84 = arith.addf %73, %83 : vector<16x128xf32>
    %c7 = arith.constant 7 : index
    %c0_66 = arith.constant 0 : index
    %c0_67 = arith.constant 0 : index
    %85 = vector.load %arg1[%c7, %c0_66, %c0_67] : memref<9x16x192xbf16, #tpu.memory_space<vmem>>, vector<1x16x192xbf16>
    %86 = vector.shape_cast %85 : vector<1x16x192xbf16> to vector<16x192xbf16>
    %cst_68 = arith.constant dense<0.000000e+00> : vector<16x128xf32>
    %87 = tpu.matmul %86, %0, %cst_68 {dimension_numbers = #tpu.dot_dimension_numbers<[1], [0], [0], [1], [0, 0, 1, 1], [], []>} : vector<16x192xbf16>, vector<192x128xbf16>, vector<16x128xf32> -> vector<16x128xf32>
    %88 = arith.addf %87, %3 : vector<16x128xf32>
    %cst_69 = arith.constant 0.000000e+00 : f32
    %89 = vector.broadcast %cst_69 : f32 to vector<16x128xf32>
    %90 = arith.maximumf %88, %89 : vector<16x128xf32>
    %91 = arith.truncf %90 : vector<16x128xf32> to vector<16x128xbf16>
    %c7_70 = arith.constant 7 : index
    %c0_71 = arith.constant 0 : index
    %c0_72 = arith.constant 0 : index
    %92 = vector.load %arg4[%c7_70, %c0_71, %c0_72] : memref<9x128x128xbf16, #tpu.memory_space<vmem>>, vector<1x128x128xbf16>
    %93 = vector.shape_cast %92 : vector<1x128x128xbf16> to vector<128x128xbf16>
    %cst_73 = arith.constant dense<0.000000e+00> : vector<16x128xf32>
    %94 = tpu.matmul %91, %93, %cst_73 {dimension_numbers = #tpu.dot_dimension_numbers<[1], [0], [0], [1], [0, 0, 1, 1], [], []>} : vector<16x128xbf16>, vector<128x128xbf16>, vector<16x128xf32> -> vector<16x128xf32>
    %95 = arith.addf %84, %94 : vector<16x128xf32>
    %c8 = arith.constant 8 : index
    %c0_74 = arith.constant 0 : index
    %c0_75 = arith.constant 0 : index
    %96 = vector.load %arg1[%c8, %c0_74, %c0_75] : memref<9x16x192xbf16, #tpu.memory_space<vmem>>, vector<1x16x192xbf16>
    %97 = vector.shape_cast %96 : vector<1x16x192xbf16> to vector<16x192xbf16>
    %cst_76 = arith.constant dense<0.000000e+00> : vector<16x128xf32>
    %98 = tpu.matmul %97, %0, %cst_76 {dimension_numbers = #tpu.dot_dimension_numbers<[1], [0], [0], [1], [0, 0, 1, 1], [], []>} : vector<16x192xbf16>, vector<192x128xbf16>, vector<16x128xf32> -> vector<16x128xf32>
    %99 = arith.addf %98, %3 : vector<16x128xf32>
    %cst_77 = arith.constant 0.000000e+00 : f32
    %100 = vector.broadcast %cst_77 : f32 to vector<16x128xf32>
    %101 = arith.maximumf %99, %100 : vector<16x128xf32>
    %102 = arith.truncf %101 : vector<16x128xf32> to vector<16x128xbf16>
    %c8_78 = arith.constant 8 : index
    %c0_79 = arith.constant 0 : index
    %c0_80 = arith.constant 0 : index
    %103 = vector.load %arg4[%c8_78, %c0_79, %c0_80] : memref<9x128x128xbf16, #tpu.memory_space<vmem>>, vector<1x128x128xbf16>
    %104 = vector.shape_cast %103 : vector<1x128x128xbf16> to vector<128x128xbf16>
    %cst_81 = arith.constant dense<0.000000e+00> : vector<16x128xf32>
    %105 = tpu.matmul %102, %104, %cst_81 {dimension_numbers = #tpu.dot_dimension_numbers<[1], [0], [0], [1], [0, 0, 1, 1], [], []>} : vector<16x128xbf16>, vector<128x128xbf16>, vector<16x128xf32> -> vector<16x128xf32>
    %106 = arith.addf %95, %105 : vector<16x128xf32>
    %107 = vector.broadcast %4 : vector<1x128xf32> to vector<16x128xf32>
    %108 = arith.addf %106, %107 : vector<16x128xf32>
    %cst_82 = arith.constant 0.000000e+00 : f32
    %109 = vector.broadcast %cst_82 : f32 to vector<16x128xf32>
    %110 = arith.maximumf %108, %109 : vector<16x128xf32>
    %111 = arith.truncf %110 : vector<16x128xf32> to vector<16x128xbf16>
    %c0_83 = arith.constant 0 : index
    %c0_84 = arith.constant 0 : index
    %112 = vector.load %arg6[%c0_83, %c0_84] : memref<128x128xbf16, #tpu.memory_space<vmem>>, vector<128x128xbf16>
    %cst_85 = arith.constant dense<0.000000e+00> : vector<16x128xf32>
    %113 = tpu.matmul %111, %112, %cst_85 {dimension_numbers = #tpu.dot_dimension_numbers<[1], [0], [0], [1], [0, 0, 1, 1], [], []>} : vector<16x128xbf16>, vector<128x128xbf16>, vector<16x128xf32> -> vector<16x128xf32>
    %114 = vector.broadcast %5 : vector<1x128xf32> to vector<16x128xf32>
    %115 = arith.addf %113, %114 : vector<16x128xf32>
    %cst_86 = arith.constant 0.000000e+00 : f32
    %116 = vector.broadcast %cst_86 : f32 to vector<16x128xf32>
    %117 = arith.maximumf %115, %116 : vector<16x128xf32>
    %118 = arith.truncf %117 : vector<16x128xf32> to vector<16x128xbf16>
    %c0_87 = arith.constant 0 : index
    %c0_88 = arith.constant 0 : index
    %119 = vector.load %arg8[%c0_87, %c0_88] : memref<128x128xbf16, #tpu.memory_space<vmem>>, vector<128x128xbf16>
    %cst_89 = arith.constant dense<0.000000e+00> : vector<16x128xf32>
    %120 = tpu.matmul %118, %119, %cst_89 {dimension_numbers = #tpu.dot_dimension_numbers<[1], [0], [0], [1], [0, 0, 1, 1], [], []>} : vector<16x128xbf16>, vector<128x128xbf16>, vector<16x128xf32> -> vector<16x128xf32>
    %121 = vector.broadcast %6 : vector<1x128xf32> to vector<16x128xf32>
    %122 = arith.addf %120, %121 : vector<16x128xf32>
    %c0_90 = arith.constant 0 : index
    %c0_91 = arith.constant 0 : index
    %123 = vector.load %arg10[%c0_90, %c0_91] : memref<16x128xf32, #tpu.memory_space<vmem>>, vector<16x128xf32>
    tpu.vector_store %arg10[%c0_90, %c0_91], %122 {strides = array<i32>} : memref<16x128xf32, #tpu.memory_space<vmem>>, vector<16x128xf32>,
    return
  }
  func.func @transform_0(%arg0: i32) -> (i32, i32, i32) {
    %c0_i32 = arith.constant 0 : i32
    %c0_i32_0 = arith.constant 0 : i32
    %c0_i32_1 = arith.constant 0 : i32
    return %c0_i32, %arg0, %c0_i32_0 : i32, i32, i32
  }
  func.func @transform_1(%arg0: i32) -> (i32, i32) {
    %c0_i32 = arith.constant 0 : i32
    %c0_i32_0 = arith.constant 0 : i32
    %c0_i32_1 = arith.constant 0 : i32
    return %c0_i32, %c0_i32_0 : i32, i32
  }
  func.func @transform_2(%arg0: i32) -> (i32, i32) {
    %c0_i32 = arith.constant 0 : i32
    %c0_i32_0 = arith.constant 0 : i32
    %c0_i32_1 = arith.constant 0 : i32
    return %c0_i32, %c0_i32_0 : i32, i32
  }
  func.func @transform_3(%arg0: i32) -> (i32, i32, i32) {
    %c0_i32 = arith.constant 0 : i32
    %c0_i32_0 = arith.constant 0 : i32
    %c0_i32_1 = arith.constant 0 : i32
    %c0_i32_2 = arith.constant 0 : i32
    return %c0_i32, %c0_i32_0, %c0_i32_1 : i32, i32, i32
  }
  func.func @transform_4(%arg0: i32) -> (i32, i32) {
    %c0_i32 = arith.constant 0 : i32
    %c0_i32_0 = arith.constant 0 : i32
    %c0_i32_1 = arith.constant 0 : i32
    return %c0_i32, %c0_i32_0 : i32, i32
  }
  func.func @transform_5(%arg0: i32) -> (i32, i32) {
    %c0_i32 = arith.constant 0 : i32
    %c0_i32_0 = arith.constant 0 : i32
    %c0_i32_1 = arith.constant 0 : i32
    return %c0_i32, %c0_i32_0 : i32, i32
  }
  func.func @transform_6(%arg0: i32) -> (i32, i32) {
    %c0_i32 = arith.constant 0 : i32
    %c0_i32_0 = arith.constant 0 : i32
    %c0_i32_1 = arith.constant 0 : i32
    return %c0_i32, %c0_i32_0 : i32, i32
  }
  func.func @transform_7(%arg0: i32) -> (i32, i32) {
    %c0_i32 = arith.constant 0 : i32
    %c0_i32_0 = arith.constant 0 : i32
    %c0_i32_1 = arith.constant 0 : i32
    return %c0_i32, %c0_i32_0 : i32, i32
  }
  func.func @transform_8(%arg0: i32) -> (i32, i32) {
    %c0_i32 = arith.constant 0 : i32
    %c0_i32_0 = arith.constant 0 : i32
    %c0_i32_1 = arith.constant 0 : i32
    return %c0_i32, %c0_i32_0 : i32, i32
  }
  func.func @transform_9(%arg0: i32) -> (i32, i32) {
    %c0_i32 = arith.constant 0 : i32
    %c0_i32_0 = arith.constant 0 : i32
    return %arg0, %c0_i32 : i32, i32
  }
}

</mosaic_0001>

<llo_original>
// kernel: critic_forward.1
$region0: #{critic_forward.1}
  #allocation0 [shape = 'u32[]', space=smem, size = 0x4, offset = 0x4, fixed_abs, tag = 'smem constant byte address 0x4 - core index']
  #allocation1 [shape = 'u32[144,128]{1,0:T(1,128)}', space=vmem, size = 0x12000, scoped, tag = 'internal scratch']
  %s0 = inlined_call_operand.vmem [shape: bf16[9,16,192], index: 0, kind: input, shape index: {}]
  %s1 = inlined_call_operand.vmem [shape: bf16[192,128], index: 1, kind: input, shape index: {}]
  %s2 = inlined_call_operand.vmem [shape: f32[1,128], index: 2, kind: input, shape index: {}]
  %s3 = inlined_call_operand.vmem [shape: bf16[9,128,128], index: 3, kind: input, shape index: {}]
  %s4 = inlined_call_operand.vmem [shape: f32[1,128], index: 4, kind: input, shape index: {}]
  %s5 = inlined_call_operand.vmem [shape: bf16[128,128], index: 5, kind: input, shape index: {}]
  %s6 = inlined_call_operand.vmem [shape: f32[1,128], index: 6, kind: input, shape index: {}]
  %s7 = inlined_call_operand.vmem [shape: bf16[128,128], index: 7, kind: input, shape index: {}]
  %s8 = inlined_call_operand.vmem [shape: f32[1,128], index: 8, kind: input, shape index: {}]
  %s9 = inlined_call_operand.vmem [shape: f32[16,128], index: 9, kind: output, shape index: {}]
  %s10 = sld [smem:[#allocation0]]
  $region46: #{critic_forward.1} parent=0
    _
  %s12 = ssub.s32 1, %s10
  %s13 = scalar_select 0, %s12, %s10
  // Predicated region
  $region2: #{critic_forward.1} parent=0 // pred_check
    _
  $region3: #{critic_forward.1} parent=0 // pred_check_branch
    %15 = sbr.rel (0) target = $region5
  $region4: #{critic_forward.1} parent=0 // pred_region
    _
  $region5: #{critic_forward.1} parent=0 // pred_fallthru
    _
  // Predicated region
  $region6: #{critic_forward.1} parent=0 // pred_check
    _
  $region7: #{critic_forward.1} parent=0 // pred_check_branch
    %17 = sbr.rel (0) target = $region9
  $region8: #{critic_forward.1} parent=0 // pred_region
    _
  $region9: #{critic_forward.1} parent=0 // pred_fallthru
    _
  // Predicated region
  $region10: #{critic_forward.1} parent=0 // pred_check
    _
  $region11: #{critic_forward.1} parent=0 // pred_check_branch
    %19 = sbr.rel (0) target = $region13
  $region12: #{critic_forward.1} parent=0 // pred_region
    _
  $region13: #{critic_forward.1} parent=0 // pred_fallthru
    _
  // Predicated region
  $region14: #{critic_forward.1} parent=0 // pred_check
    _
  $region15: #{critic_forward.1} parent=0 // pred_check_branch
    %21 = sbr.rel (0) target = $region17
  $region16: #{critic_forward.1} parent=0 // pred_region
    _
  $region17: #{critic_forward.1} parent=0 // pred_fallthru
    _
  // Predicated region
  $region18: #{critic_forward.1} parent=0 // pred_check
    _
  $region19: #{critic_forward.1} parent=0 // pred_check_branch
    %23 = sbr.rel (0) target = $region21
  $region20: #{critic_forward.1} parent=0 // pred_region
    _
  $region21: #{critic_forward.1} parent=0 // pred_fallthru
    _
  // Predicated region
  $region22: #{critic_forward.1} parent=0 // pred_check
    _
  $region23: #{critic_forward.1} parent=0 // pred_check_branch
    %25 = sbr.rel (0) target = $region25
  $region24: #{critic_forward.1} parent=0 // pred_region
    _
  $region25: #{critic_forward.1} parent=0 // pred_fallthru
    _
  // Predicated region
  $region26: #{critic_forward.1} parent=0 // pred_check
    _
  $region27: #{critic_forward.1} parent=0 // pred_check_branch
    %27 = sbr.rel (0) target = $region29
  $region28: #{critic_forward.1} parent=0 // pred_region
    _
  $region29: #{critic_forward.1} parent=0 // pred_fallthru
    _
  // Predicated region
  $region30: #{critic_forward.1} parent=0 // pred_check
    _
  $region31: #{critic_forward.1} parent=0 // pred_check_branch
    %29 = sbr.rel (0) target = $region33
  $region32: #{critic_forward.1} parent=0 // pred_region
    _
  $region33: #{critic_forward.1} parent=0 // pred_fallthru
    _
  // Predicated region
  $region34: #{critic_forward.1} parent=0 // pred_check
    _
  $region35: #{critic_forward.1} parent=0 // pred_check_branch
    %31 = sbr.rel (0) target = $region37
  $region36: #{critic_forward.1} parent=0 // pred_region
    _
  $region37: #{critic_forward.1} parent=0 // pred_fallthru
    _
  %v33 = vld [vmem:[%s1] sm:$0xf]
  %v34 = vld [vmem:[%s1 + $0x4] sm:$0xf]
  %v35 = vld [vmem:[%s1 + $0x8] sm:$0xf]
  %v36 = vld [vmem:[%s1 + $0xc] sm:$0xf]
  %v37 = vld [vmem:[%s1 + $0x10] sm:$0xf]
  %v38 = vld [vmem:[%s1 + $0x14] sm:$0xf]
  %v39 = vld [vmem:[%s1 + $0x18] sm:$0xf]
  %v40 = vld [vmem:[%s1 + $0x1c] sm:$0xf]
  %v41 = vld [vmem:[%s1 + $0x20] sm:$0xf]
  %v42 = vld [vmem:[%s1 + $0x24] sm:$0xf]
  %v43 = vld [vmem:[%s1 + $0x28] sm:$0xf]
  %v44 = vld [vmem:[%s1 + $0x2c] sm:$0xf]
  %v45 = vld [vmem:[%s1 + $0x30] sm:$0xf]
  %v46 = vld [vmem:[%s1 + $0x34] sm:$0xf]
  %v47 = vld [vmem:[%s1 + $0x38] sm:$0xf]
  %v48 = vld [vmem:[%s1 + $0x3c] sm:$0xf]
  %v49 = vld [vmem:[%s1 + $0x40] sm:$0xf]
  %v50 = vld [vmem:[%s1 + $0x44] sm:$0xf]
  %v51 = vld [vmem:[%s1 + $0x48] sm:$0xf]
  %v52 = vld [vmem:[%s1 + $0x4c] sm:$0xf]
  %v53 = vld [vmem:[%s1 + $0x50] sm:$0xf]
  %v54 = vld [vmem:[%s1 + $0x54] sm:$0xf]
  %v55 = vld [vmem:[%s1 + $0x58] sm:$0xf]
  %v56 = vld [vmem:[%s1 + $0x5c] sm:$0xf]
  %v57 = vld [vmem:[%s2] sm:$0x1]
  %v59 = vlaneseq
  %v60 = vshrl.u32 %v59, 7
  %v61 = vsub.s32 0, %v60
  %v62 = vrot.slane %v57, %v61
  %v64 = vld [vmem:[%s4] sm:$0x1]
  %v65 = vld [vmem:[%s6] sm:$0x1]
  %v66 = vld [vmem:[%s8] sm:$0x1]
  %v67 = vld [vmem:[%s0] sm:$0xff]
  %v68 = vld [vmem:[%s0 + $0x8] sm:$0xff]
  %v71 = vunpack.c.l.b16 %v67
  %v72 = vunpack.c.h.b16 %v67
  %v73 = vunpack.c.l.b16 %v68
  %v74 = vunpack.c.h.b16 %v68
  %v75 = vpack.c.b16 %v73, %v71
  %v76 = vpack.c.b16 %v74, %v72
  %v102 = vunpack.c.l.b16 %v33
  %v103 = vunpack.c.l.b16 %v34
  %v104 = vunpack.c.l.b16 %v35
  %v105 = vunpack.c.l.b16 %v36
  %v106 = vunpack.c.l.b16 %v37
  %v107 = vunpack.c.l.b16 %v38
  %v108 = vunpack.c.l.b16 %v39
  %v109 = vunpack.c.l.b16 %v40
  %v110 = vunpack.c.l.b16 %v41
  %v111 = vunpack.c.l.b16 %v42
  %v112 = vunpack.c.l.b16 %v43
  %v113 = vunpack.c.l.b16 %v44
  %v114 = vunpack.c.l.b16 %v45
  %v115 = vunpack.c.l.b16 %v46
  %v116 = vunpack.c.l.b16 %v47
  %v117 = vunpack.c.l.b16 %v48
  %v118 = vunpack.c.l.b16 %v49
  %v119 = vunpack.c.l.b16 %v50
  %v120 = vunpack.c.l.b16 %v51
  %v121 = vunpack.c.l.b16 %v52
  %v122 = vunpack.c.l.b16 %v53
  %v123 = vunpack.c.l.b16 %v54
  %v124 = vunpack.c.l.b16 %v55
  %v125 = vunpack.c.l.b16 %v56
  %v126 = vpack.c.b16 %v103, %v102
  %v127 = vpack.c.b16 %v105, %v104
  %v128 = vpack.c.b16 %v107, %v106
  %v129 = vpack.c.b16 %v109, %v108
  %v130 = vpack.c.b16 %v111, %v110
  %v131 = vpack.c.b16 %v113, %v112
  %v132 = vpack.c.b16 %v115, %v114
  %v133 = vpack.c.b16 %v117, %v116
  %v134 = vpack.c.b16 %v119, %v118
  %v135 = vpack.c.b16 %v121, %v120
  %v136 = vpack.c.b16 %v123, %v122
  %v137 = vpack.c.b16 %v125, %v124
  %vm150 = vcmask 523264
  %v152 = vsel %vm150, %v76, 0
  %154 = vmatprep.subr.bf16.mxu0 0
  %155 = vmatpush1.bf16.msra.mxu0 %v133
  %156 = vmatprep.subr.bf16.mxu0 0
  %157 = vmatpush1.bf16.msra.mxu0 %v132
  %158 = vmatprep.subr.bf16.mxu0 0
  %159 = vmatpush1.bf16.msra.mxu0 %v131
  %160 = vmatprep.subr.bf16.mxu0 0
  %161 = vmatpush1.bf16.msra.mxu0 %v130
  %162 = vmatprep.subr.bf16.mxu0 0
  %163 = vmatpush1.bf16.msra.mxu0 %v129
  %164 = vmatprep.subr.bf16.mxu0 0
  %165 = vmatpush1.bf16.msra.mxu0 %v128
  %166 = vmatprep.subr.bf16.mxu0 0
  %167 = vmatpush1.bf16.msra.mxu0 %v127
  %168 = vmatprep.subr.bf16.mxu0 0
  %169 = vmatpush1.bf16.msra.mxu0 %v126
  %170 = vmatprep.subr.bf16.mxu0 0
  %171 = vmatpush2.bf16.msra.mxu0 0
  %172 = vmatprep.subr.bf16.mxu0 0
  %173 = vmatpush2.bf16.msra.mxu0 0
  %174 = vmatprep.subr.bf16.mxu0 0
  %175 = vmatpush2.bf16.msra.mxu0 0
  %176 = vmatprep.subr.bf16.mxu0 0
  %177 = vmatpush2.bf16.msra.mxu0 0
  %178 = vmatprep.subr.bf16.mxu0 0
  %179 = vmatpush2.bf16.msra.mxu0 %v137
  %180 = vmatprep.subr.bf16.mxu0 0
  %181 = vmatpush2.bf16.msra.mxu0 %v136
  %182 = vmatprep.subr.bf16.mxu0 0
  %183 = vmatpush2.bf16.msra.mxu0 %v135
  %184 = vmatprep.subr.bf16.mxu0 0
  %185 = vmatpush2.bf16.msra.mxu0 %v134
  %186 = vmatprep.mubr.bf16.mxu0 %v152
  %187 = vmatmul.mubr.bf16.gmra.mxu0 %v75
  %v188 = vpop.f32.mrf.mxu0
  %v189 = vadd.f32 %v62, %v188
  %v190 = vpop.f32.mrf.mxu0
  %v191 = vpop.f32.mrf.mxu0
  %v192 = vadd.f32 %v62, %v191
  %v193 = vpop.f32.mrf.mxu0
  %194 = vdwg.mxu0
  %v195 = vmax.f32 %v189, 0.0
  %v196 = vmax.f32 %v192, 0.0
  %v197 = vpack.c.bf16 %v196, %v195
  %v198 = vld [vmem:[%s3] sm:$0xf]
  %v199 = vld [vmem:[%s3 + $0x4] sm:$0xf]
  %v200 = vld [vmem:[%s3 + $0x8] sm:$0xf]
  %v201 = vld [vmem:[%s3 + $0xc] sm:$0xf]
  %v202 = vld [vmem:[%s3 + $0x10] sm:$0xf]
  %v203 = vld [vmem:[%s3 + $0x14] sm:$0xf]
  %v204 = vld [vmem:[%s3 + $0x18] sm:$0xf]
  %v205 = vld [vmem:[%s3 + $0x1c] sm:$0xf]
  %v206 = vld [vmem:[%s3 + $0x20] sm:$0xf]
  %v207 = vld [vmem:[%s3 + $0x24] sm:$0xf]
  %v208 = vld [vmem:[%s3 + $0x28] sm:$0xf]
  %v209 = vld [vmem:[%s3 + $0x2c] sm:$0xf]
  %v210 = vld [vmem:[%s3 + $0x30] sm:$0xf]
  %v211 = vld [vmem:[%s3 + $0x34] sm:$0xf]
  %v212 = vld [vmem:[%s3 + $0x38] sm:$0xf]
  %v213 = vld [vmem:[%s3 + $0x3c] sm:$0xf]
  %s214 = scalar_lea.vmem %s0, 16
  %v215 = vld [vmem:[%s214] sm:$0xff]
  %v216 = vld [vmem:[%s214 + $0x8] sm:$0xff]
  %v219 = vunpack.c.l.b16 %v215
  %v220 = vunpack.c.h.b16 %v215
  %v221 = vunpack.c.l.b16 %v216
  %v222 = vunpack.c.h.b16 %v216
  %v223 = vpack.c.b16 %v221, %v219
  %v224 = vpack.c.b16 %v222, %v220
  %v227 = vsel %vm150, %v224, 0
  %229 = vmatprep.subr.bf16.mxu0 0
  %230 = vmatpush1.bf16.msra.mxu0 %v133
  %231 = vmatprep.subr.bf16.mxu0 0
  %232 = vmatpush1.bf16.msra.mxu0 %v132
  %233 = vmatprep.subr.bf16.mxu0 0
  %234 = vmatpush1.bf16.msra.mxu0 %v131
  %235 = vmatprep.subr.bf16.mxu0 0
  %236 = vmatpush1.bf16.msra.mxu0 %v130
  %237 = vmatprep.subr.bf16.mxu0 0
  %238 = vmatpush1.bf16.msra.mxu0 %v129
  %239 = vmatprep.subr.bf16.mxu0 0
  %240 = vmatpush1.bf16.msra.mxu0 %v128
  %241 = vmatprep.subr.bf16.mxu0 0
  %242 = vmatpush1.bf16.msra.mxu0 %v127
  %243 = vmatprep.subr.bf16.mxu0 0
  %244 = vmatpush1.bf16.msra.mxu0 %v126
  %245 = vmatprep.subr.bf16.mxu0 0
  %246 = vmatpush2.bf16.msra.mxu0 0
  %247 = vmatprep.subr.bf16.mxu0 0
  %248 = vmatpush2.bf16.msra.mxu0 0
  %249 = vmatprep.subr.bf16.mxu0 0
  %250 = vmatpush2.bf16.msra.mxu0 0
  %251 = vmatprep.subr.bf16.mxu0 0
  %252 = vmatpush2.bf16.msra.mxu0 0
  %253 = vmatprep.subr.bf16.mxu0 0
  %254 = vmatpush2.bf16.msra.mxu0 %v137
  %255 = vmatprep.subr.bf16.mxu0 0
  %256 = vmatpush2.bf16.msra.mxu0 %v136
  %257 = vmatprep.subr.bf16.mxu0 0
  %258 = vmatpush2.bf16.msra.mxu0 %v135
  %259 = vmatprep.subr.bf16.mxu0 0
  %260 = vmatpush2.bf16.msra.mxu0 %v134
  %261 = vmatprep.mubr.bf16.mxu0 %v227
  %262 = vmatmul.mubr.bf16.gmra.mxu0 %v223
  %v263 = vpop.f32.mrf.mxu0
  %v264 = vadd.f32 %v62, %v263
  %v265 = vpop.f32.mrf.mxu0
  %v266 = vpop.f32.mrf.mxu0
  %v267 = vadd.f32 %v62, %v266
  %v268 = vpop.f32.mrf.mxu0
  %269 = vdwg.mxu0
  %v270 = vmax.f32 %v264, 0.0
  %v271 = vmax.f32 %v267, 0.0
  %v272 = vpack.c.bf16 %v271, %v270
  %s273 = scalar_lea.vmem %s3, 64
  %v274 = vld [vmem:[%s273] sm:$0xf]
  %v275 = vld [vmem:[%s273 + $0x4] sm:$0xf]
  %v276 = vld [vmem:[%s273 + $0x8] sm:$0xf]
  %v277 = vld [vmem:[%s273 + $0xc] sm:$0xf]
  %v278 = vld [vmem:[%s273 + $0x10] sm:$0xf]
  %v279 = vld [vmem:[%s273 + $0x14] sm:$0xf]
  %v280 = vld [vmem:[%s273 + $0x18] sm:$0xf]
  %v281 = vld [vmem:[%s273 + $0x1c] sm:$0xf]
  %v282 = vld [vmem:[%s273 + $0x20] sm:$0xf]
  %v283 = vld [vmem:[%s273 + $0x24] sm:$0xf]
  %v284 = vld [vmem:[%s273 + $0x28] sm:$0xf]
  %v285 = vld [vmem:[%s273 + $0x2c] sm:$0xf]
  %v286 = vld [vmem:[%s273 + $0x30] sm:$0xf]
  %v287 = vld [vmem:[%s273 + $0x34] sm:$0xf]
  %v288 = vld [vmem:[%s273 + $0x38] sm:$0xf]
  %v289 = vld [vmem:[%s273 + $0x3c] sm:$0xf]
  %v306 = vunpack.c.l.b16 %v274
  %v307 = vunpack.c.l.b16 %v275
  %v308 = vunpack.c.l.b16 %v276
  %v309 = vunpack.c.l.b16 %v277
  %v310 = vunpack.c.l.b16 %v278
  %v311 = vunpack.c.l.b16 %v279
  %v312 = vunpack.c.l.b16 %v280
  %v313 = vunpack.c.l.b16 %v281
  %v314 = vunpack.c.l.b16 %v282
  %v315 = vunpack.c.l.b16 %v283
  %v316 = vunpack.c.l.b16 %v284
  %v317 = vunpack.c.l.b16 %v285
  %v318 = vunpack.c.l.b16 %v286
  %v319 = vunpack.c.l.b16 %v287
  %v320 = vunpack.c.l.b16 %v288
  %v321 = vunpack.c.l.b16 %v289
  %v322 = vpack.c.b16 %v307, %v306
  %v323 = vpack.c.b16 %v309, %v308
  %v324 = vpack.c.b16 %v311, %v310
  %v325 = vpack.c.b16 %v313, %v312
  %v326 = vpack.c.b16 %v315, %v314
  %v327 = vpack.c.b16 %v317, %v316
  %v328 = vpack.c.b16 %v319, %v318
  %v329 = vpack.c.b16 %v321, %v320
  %338 = vmatprep.subr.bf16.mxu0 0
  %339 = vmatpush1.bf16.msra.mxu0 %v329
  %340 = vmatprep.subr.bf16.mxu0 0
  %341 = vmatpush1.bf16.msra.mxu0 %v328
  %342 = vmatprep.subr.bf16.mxu0 0
  %343 = vmatpush1.bf16.msra.mxu0 %v327
  %344 = vmatprep.subr.bf16.mxu0 0
  %345 = vmatpush1.bf16.msra.mxu0 %v326
  %346 = vmatprep.subr.bf16.mxu0 0
  %347 = vmatpush1.bf16.msra.mxu0 %v325
  %348 = vmatprep.subr.bf16.mxu0 0
  %349 = vmatpush1.bf16.msra.mxu0 %v324
  %350 = vmatprep.subr.bf16.mxu0 0
  %351 = vmatpush1.bf16.msra.mxu0 %v323
  %352 = vmatprep.subr.bf16.mxu0 0
  %353 = vmatpush1.bf16.msra.mxu0 %v322
  %354 = vmatprep.subr.bf16.mxu0 0
  %355 = vmatpush2.bf16.msra.mxu0 0
  %356 = vmatprep.subr.bf16.mxu0 0
  %357 = vmatpush2.bf16.msra.mxu0 0
  %358 = vmatprep.subr.bf16.mxu0 0
  %359 = vmatpush2.bf16.msra.mxu0 0
  %360 = vmatprep.subr.bf16.mxu0 0
  %361 = vmatpush2.bf16.msra.mxu0 0
  %362 = vmatprep.subr.bf16.mxu0 0
  %363 = vmatpush2.bf16.msra.mxu0 0
  %364 = vmatprep.subr.bf16.mxu0 0
  %365 = vmatpush2.bf16.msra.mxu0 0
  %366 = vmatprep.subr.bf16.mxu0 0
  %367 = vmatpush2.bf16.msra.mxu0 0
  %368 = vmatprep.subr.bf16.mxu0 0
  %369 = vmatpush2.bf16.msra.mxu0 0
  %370 = vmatprep.mubr.bf16.mxu0 0
  %371 = vmatmul.mubr.bf16.gmra.mxu0 %v272
  %v372 = vpop.f32.mrf.mxu0
  %v373 = vadd.f32 0.0, %v372
  %v374 = vpop.f32.mrf.mxu0
  %v375 = vpop.f32.mrf.mxu0
  %v376 = vadd.f32 0.0, %v375
  %v377 = vpop.f32.mrf.mxu0
  %378 = vdwg.mxu0
  %v395 = vunpack.c.l.b16 %v198
  %v396 = vunpack.c.l.b16 %v199
  %v397 = vunpack.c.l.b16 %v200
  %v398 = vunpack.c.l.b16 %v201
  %v399 = vunpack.c.l.b16 %v202
  %v400 = vunpack.c.l.b16 %v203
  %v401 = vunpack.c.l.b16 %v204
  %v402 = vunpack.c.l.b16 %v205
  %v403 = vunpack.c.l.b16 %v206
  %v404 = vunpack.c.l.b16 %v207
  %v405 = vunpack.c.l.b16 %v208
  %v406 = vunpack.c.l.b16 %v209
  %v407 = vunpack.c.l.b16 %v210
  %v408 = vunpack.c.l.b16 %v211
  %v409 = vunpack.c.l.b16 %v212
  %v410 = vunpack.c.l.b16 %v213
  %v411 = vpack.c.b16 %v396, %v395
  %v412 = vpack.c.b16 %v398, %v397
  %v413 = vpack.c.b16 %v400, %v399
  %v414 = vpack.c.b16 %v402, %v401
  %v415 = vpack.c.b16 %v404, %v403
  %v416 = vpack.c.b16 %v406, %v405
  %v417 = vpack.c.b16 %v408, %v407
  %v418 = vpack.c.b16 %v410, %v409
  %427 = vmatprep.subr.bf16.mxu0 0
  %428 = vmatpush1.bf16.msra.mxu0 %v418
  %429 = vmatprep.subr.bf16.mxu0 0
  %430 = vmatpush1.bf16.msra.mxu0 %v417
  %431 = vmatprep.subr.bf16.mxu0 0
  %432 = vmatpush1.bf16.msra.mxu0 %v416
  %433 = vmatprep.subr.bf16.mxu0 0
  %434 = vmatpush1.bf16.msra.mxu0 %v415
  %435 = vmatprep.subr.bf16.mxu0 0
  %436 = vmatpush1.bf16.msra.mxu0 %v414
  %437 = vmatprep.subr.bf16.mxu0 0
  %438 = vmatpush1.bf16.msra.mxu0 %v413
  %439 = vmatprep.subr.bf16.mxu0 0
  %440 = vmatpush1.bf16.msra.mxu0 %v412
  %441 = vmatprep.subr.bf16.mxu0 0
  %442 = vmatpush1.bf16.msra.mxu0 %v411
  %443 = vmatprep.subr.bf16.mxu0 0
  %444 = vmatpush2.bf16.msra.mxu0 0
  %445 = vmatprep.subr.bf16.mxu0 0
  %446 = vmatpush2.bf16.msra.mxu0 0
  %447 = vmatprep.subr.bf16.mxu0 0
  %448 = vmatpush2.bf16.msra.mxu0 0
  %449 = vmatprep.subr.bf16.mxu0 0
  %450 = vmatpush2.bf16.msra.mxu0 0
  %451 = vmatprep.subr.bf16.mxu0 0
  %452 = vmatpush2.bf16.msra.mxu0 0
  %453 = vmatprep.subr.bf16.mxu0 0
  %454 = vmatpush2.bf16.msra.mxu0 0
  %455 = vmatprep.subr.bf16.mxu0 0
  %456 = vmatpush2.bf16.msra.mxu0 0
  %457 = vmatprep.subr.bf16.mxu0 0
  %458 = vmatpush2.bf16.msra.mxu0 0
  %459 = vmatprep.mubr.bf16.mxu0 0
  %460 = vmatmul.mubr.bf16.gmra.mxu0 %v197
  %v461 = vpop.f32.mrf.mxu0
  %v462 = vadd.f32 %v373, %v461
  %v463 = vpop.f32.mrf.mxu0
  %v464 = vpop.f32.mrf.mxu0
  %v465 = vadd.f32 %v376, %v464
  %v466 = vpop.f32.mrf.mxu0
  %467 = vdwg.mxu0
  %s468 = scalar_lea.vmem %s0, 32
  %v469 = vld [vmem:[%s468] sm:$0xff]
  %v470 = vld [vmem:[%s468 + $0x8] sm:$0xff]
  %v473 = vunpack.c.l.b16 %v469
  %v474 = vunpack.c.h.b16 %v469
  %v475 = vunpack.c.l.b16 %v470
  %v476 = vunpack.c.h.b16 %v470
  %v477 = vpack.c.b16 %v475, %v473
  %v478 = vpack.c.b16 %v476, %v474
  %v481 = vsel %vm150, %v478, 0
  %483 = vmatprep.subr.bf16.mxu0 0
  %484 = vmatpush1.bf16.msra.mxu0 %v133
  %485 = vmatprep.subr.bf16.mxu0 0
  %486 = vmatpush1.bf16.msra.mxu0 %v132
  %487 = vmatprep.subr.bf16.mxu0 0
  %488 = vmatpush1.bf16.msra.mxu0 %v131
  %489 = vmatprep.subr.bf16.mxu0 0
  %490 = vmatpush1.bf16.msra.mxu0 %v130
  %491 = vmatprep.subr.bf16.mxu0 0
  %492 = vmatpush1.bf16.msra.mxu0 %v129
  %493 = vmatprep.subr.bf16.mxu0 0
  %494 = vmatpush1.bf16.msra.mxu0 %v128
  %495 = vmatprep.subr.bf16.mxu0 0
  %496 = vmatpush1.bf16.msra.mxu0 %v127
  %497 = vmatprep.subr.bf16.mxu0 0
  %498 = vmatpush1.bf16.msra.mxu0 %v126
  %499 = vmatprep.subr.bf16.mxu0 0
  %500 = vmatpush2.bf16.msra.mxu0 0
  %501 = vmatprep.subr.bf16.mxu0 0
  %502 = vmatpush2.bf16.msra.mxu0 0
  %503 = vmatprep.subr.bf16.mxu0 0
  %504 = vmatpush2.bf16.msra.mxu0 0
  %505 = vmatprep.subr.bf16.mxu0 0
  %506 = vmatpush2.bf16.msra.mxu0 0
  %507 = vmatprep.subr.bf16.mxu0 0
  %508 = vmatpush2.bf16.msra.mxu0 %v137
  %509 = vmatprep.subr.bf16.mxu0 0
  %510 = vmatpush2.bf16.msra.mxu0 %v136
  %511 = vmatprep.subr.bf16.mxu0 0
  %512 = vmatpush2.bf16.msra.mxu0 %v135
  %513 = vmatprep.subr.bf16.mxu0 0
  %514 = vmatpush2.bf16.msra.mxu0 %v134
  %515 = vmatprep.mubr.bf16.mxu0 %v481
  %516 = vmatmul.mubr.bf16.gmra.mxu0 %v477
  %v517 = vpop.f32.mrf.mxu0
  %v518 = vadd.f32 %v62, %v517
  %v519 = vpop.f32.mrf.mxu0
  %v520 = vpop.f32.mrf.mxu0
  %v521 = vadd.f32 %v62, %v520
  %v522 = vpop.f32.mrf.mxu0
  %523 = vdwg.mxu0
  %v524 = vmax.f32 %v518, 0.0
  %v525 = vmax.f32 %v521, 0.0
  %v526 = vpack.c.bf16 %v525, %v524
  %s527 = scalar_lea.vmem %s3, 128
  %v528 = vld [vmem:[%s527] sm:$0xf]
  %v529 = vld [vmem:[%s527 + $0x4] sm:$0xf]
  %v530 = vld [vmem:[%s527 + $0x8] sm:$0xf]
  %v531 = vld [vmem:[%s527 + $0xc] sm:$0xf]
  %v532 = vld [vmem:[%s527 + $0x10] sm:$0xf]
  %v533 = vld [vmem:[%s527 + $0x14] sm:$0xf]
  %v534 = vld [vmem:[%s527 + $0x18] sm:$0xf]
  %v535 = vld [vmem:[%s527 + $0x1c] sm:$0xf]
  %v536 = vld [vmem:[%s527 + $0x20] sm:$0xf]
  %v537 = vld [vmem:[%s527 + $0x24] sm:$0xf]
  %v538 = vld [vmem:[%s527 + $0x28] sm:$0xf]
  %v539 = vld [vmem:[%s527 + $0x2c] sm:$0xf]
  %v540 = vld [vmem:[%s527 + $0x30] sm:$0xf]
  %v541 = vld [vmem:[%s527 + $0x34] sm:$0xf]
  %v542 = vld [vmem:[%s527 + $0x38] sm:$0xf]
  %v543 = vld [vmem:[%s527 + $0x3c] sm:$0xf]
  %v560 = vunpack.c.l.b16 %v528
  %v561 = vunpack.c.l.b16 %v529
  %v562 = vunpack.c.l.b16 %v530
  %v563 = vunpack.c.l.b16 %v531
  %v564 = vunpack.c.l.b16 %v532
  %v565 = vunpack.c.l.b16 %v533
  %v566 = vunpack.c.l.b16 %v534
  %v567 = vunpack.c.l.b16 %v535
  %v568 = vunpack.c.l.b16 %v536
  %v569 = vunpack.c.l.b16 %v537
  %v570 = vunpack.c.l.b16 %v538
  %v571 = vunpack.c.l.b16 %v539
  %v572 = vunpack.c.l.b16 %v540
  %v573 = vunpack.c.l.b16 %v541
  %v574 = vunpack.c.l.b16 %v542
  %v575 = vunpack.c.l.b16 %v543
  %v576 = vpack.c.b16 %v561, %v560
  %v577 = vpack.c.b16 %v563, %v562
  %v578 = vpack.c.b16 %v565, %v564
  %v579 = vpack.c.b16 %v567, %v566
  %v580 = vpack.c.b16 %v569, %v568
  %v581 = vpack.c.b16 %v571, %v570
  %v582 = vpack.c.b16 %v573, %v572
  %v583 = vpack.c.b16 %v575, %v574
  %592 = vmatprep.subr.bf16.mxu0 0
  %593 = vmatpush1.bf16.msra.mxu0 %v583
  %594 = vmatprep.subr.bf16.mxu0 0
  %595 = vmatpush1.bf16.msra.mxu0 %v582
  %596 = vmatprep.subr.bf16.mxu0 0
  %597 = vmatpush1.bf16.msra.mxu0 %v581
  %598 = vmatprep.subr.bf16.mxu0 0
  %599 = vmatpush1.bf16.msra.mxu0 %v580
  %600 = vmatprep.subr.bf16.mxu0 0
  %601 = vmatpush1.bf16.msra.mxu0 %v579
  %602 = vmatprep.subr.bf16.mxu0 0
  %603 = vmatpush1.bf16.msra.mxu0 %v578
  %604 = vmatprep.subr.bf16.mxu0 0
  %605 = vmatpush1.bf16.msra.mxu0 %v577
  %606 = vmatprep.subr.bf16.mxu0 0
  %607 = vmatpush1.bf16.msra.mxu0 %v576
  %608 = vmatprep.subr.bf16.mxu0 0
  %609 = vmatpush2.bf16.msra.mxu0 0
  %610 = vmatprep.subr.bf16.mxu0 0
  %611 = vmatpush2.bf16.msra.mxu0 0
  %612 = vmatprep.subr.bf16.mxu0 0
  %613 = vmatpush2.bf16.msra.mxu0 0
  %614 = vmatprep.subr.bf16.mxu0 0
  %615 = vmatpush2.bf16.msra.mxu0 0
  %616 = vmatprep.subr.bf16.mxu0 0
  %617 = vmatpush2.bf16.msra.mxu0 0
  %618 = vmatprep.subr.bf16.mxu0 0
  %619 = vmatpush2.bf16.msra.mxu0 0
  %620 = vmatprep.subr.bf16.mxu0 0
  %621 = vmatpush2.bf16.msra.mxu0 0
  %622 = vmatprep.subr.bf16.mxu0 0
  %623 = vmatpush2.bf16.msra.mxu0 0
  %624 = vmatprep.mubr.bf16.mxu0 0
  %625 = vmatmul.mubr.bf16.gmra.mxu0 %v526
  %v626 = vpop.f32.mrf.mxu0
  %v627 = vadd.f32 0.0, %v626
  %v628 = vpop.f32.mrf.mxu0
  %v629 = vpop.f32.mrf.mxu0
  %v630 = vadd.f32 0.0, %v629
  %v631 = vpop.f32.mrf.mxu0
  %632 = vdwg.mxu0
  %v633 = vadd.f32 %v462, %v627
  %v634 = vadd.f32 %v465, %v630
  %s635 = scalar_lea.vmem %s0, 48
  %v636 = vld [vmem:[%s635] sm:$0xff]
  %v637 = vld [vmem:[%s635 + $0x8] sm:$0xff]
  %v640 = vunpack.c.l.b16 %v636
  %v641 = vunpack.c.h.b16 %v636
  %v642 = vunpack.c.l.b16 %v637
  %v643 = vunpack.c.h.b16 %v637
  %v644 = vpack.c.b16 %v642, %v640
  %v645 = vpack.c.b16 %v643, %v641
  %v648 = vsel %vm150, %v645, 0
  %650 = vmatprep.subr.bf16.mxu0 0
  %651 = vmatpush1.bf16.msra.mxu0 %v133
  %652 = vmatprep.subr.bf16.mxu0 0
  %653 = vmatpush1.bf16.msra.mxu0 %v132
  %654 = vmatprep.subr.bf16.mxu0 0
  %655 = vmatpush1.bf16.msra.mxu0 %v131
  %656 = vmatprep.subr.bf16.mxu0 0
  %657 = vmatpush1.bf16.msra.mxu0 %v130
  %658 = vmatprep.subr.bf16.mxu0 0
  %659 = vmatpush1.bf16.msra.mxu0 %v129
  %660 = vmatprep.subr.bf16.mxu0 0
  %661 = vmatpush1.bf16.msra.mxu0 %v128
  %662 = vmatprep.subr.bf16.mxu0 0
  %663 = vmatpush1.bf16.msra.mxu0 %v127
  %664 = vmatprep.subr.bf16.mxu0 0
  %665 = vmatpush1.bf16.msra.mxu0 %v126
  %666 = vmatprep.subr.bf16.mxu0 0
  %667 = vmatpush2.bf16.msra.mxu0 0
  %668 = vmatprep.subr.bf16.mxu0 0
  %669 = vmatpush2.bf16.msra.mxu0 0
  %670 = vmatprep.subr.bf16.mxu0 0
  %671 = vmatpush2.bf16.msra.mxu0 0
  %672 = vmatprep.subr.bf16.mxu0 0
  %673 = vmatpush2.bf16.msra.mxu0 0
  %674 = vmatprep.subr.bf16.mxu0 0
  %675 = vmatpush2.bf16.msra.mxu0 %v137
  %676 = vmatprep.subr.bf16.mxu0 0
  %677 = vmatpush2.bf16.msra.mxu0 %v136
  %678 = vmatprep.subr.bf16.mxu0 0
  %679 = vmatpush2.bf16.msra.mxu0 %v135
  %680 = vmatprep.subr.bf16.mxu0 0
  %681 = vmatpush2.bf16.msra.mxu0 %v134
  %682 = vmatprep.mubr.bf16.mxu0 %v648
  %683 = vmatmul.mubr.bf16.gmra.mxu0 %v644
  %v684 = vpop.f32.mrf.mxu0
  %v685 = vadd.f32 %v62, %v684
  %v686 = vpop.f32.mrf.mxu0
  %v687 = vpop.f32.mrf.mxu0
  %v688 = vadd.f32 %v62, %v687
  %v689 = vpop.f32.mrf.mxu0
  %690 = vdwg.mxu0
  %v691 = vmax.f32 %v685, 0.0
  %v692 = vmax.f32 %v688, 0.0
  %v693 = vpack.c.bf16 %v692, %v691
  %s694 = scalar_lea.vmem %s3, 192
  %v695 = vld [vmem:[%s694] sm:$0xf]
  %v696 = vld [vmem:[%s694 + $0x4] sm:$0xf]
  %v697 = vld [vmem:[%s694 + $0x8] sm:$0xf]
  %v698 = vld [vmem:[%s694 + $0xc] sm:$0xf]
  %v699 = vld [vmem:[%s694 + $0x10] sm:$0xf]
  %v700 = vld [vmem:[%s694 + $0x14] sm:$0xf]
  %v701 = vld [vmem:[%s694 + $0x18] sm:$0xf]
  %v702 = vld [vmem:[%s694 + $0x1c] sm:$0xf]
  %v703 = vld [vmem:[%s694 + $0x20] sm:$0xf]
  %v704 = vld [vmem:[%s694 + $0x24] sm:$0xf]
  %v705 = vld [vmem:[%s694 + $0x28] sm:$0xf]
  %v706 = vld [vmem:[%s694 + $0x2c] sm:$0xf]
  %v707 = vld [vmem:[%s694 + $0x30] sm:$0xf]
  %v708 = vld [vmem:[%s694 + $0x34] sm:$0xf]
  %v709 = vld [vmem:[%s694 + $0x38] sm:$0xf]
  %v710 = vld [vmem:[%s694 + $0x3c] sm:$0xf]
  %v727 = vunpack.c.l.b16 %v695
  %v728 = vunpack.c.l.b16 %v696
  %v729 = vunpack.c.l.b16 %v697
  %v730 = vunpack.c.l.b16 %v698
  %v731 = vunpack.c.l.b16 %v699
  %v732 = vunpack.c.l.b16 %v700
  %v733 = vunpack.c.l.b16 %v701
  %v734 = vunpack.c.l.b16 %v702
  %v735 = vunpack.c.l.b16 %v703
  %v736 = vunpack.c.l.b16 %v704
  %v737 = vunpack.c.l.b16 %v705
  %v738 = vunpack.c.l.b16 %v706
  %v739 = vunpack.c.l.b16 %v707
  %v740 = vunpack.c.l.b16 %v708
  %v741 = vunpack.c.l.b16 %v709
  %v742 = vunpack.c.l.b16 %v710
  %v743 = vpack.c.b16 %v728, %v727
  %v744 = vpack.c.b16 %v730, %v729
  %v745 = vpack.c.b16 %v732, %v731
  %v746 = vpack.c.b16 %v734, %v733
  %v747 = vpack.c.b16 %v736, %v735
  %v748 = vpack.c.b16 %v738, %v737
  %v749 = vpack.c.b16 %v740, %v739
  %v750 = vpack.c.b16 %v742, %v741
  %759 = vmatprep.subr.bf16.mxu0 0
  %760 = vmatpush1.bf16.msra.mxu0 %v750
  %761 = vmatprep.subr.bf16.mxu0 0
  %762 = vmatpush1.bf16.msra.mxu0 %v749
  %763 = vmatprep.subr.bf16.mxu0 0
  %764 = vmatpush1.bf16.msra.mxu0 %v748
  %765 = vmatprep.subr.bf16.mxu0 0
  %766 = vmatpush1.bf16.msra.mxu0 %v747
  %767 = vmatprep.subr.bf16.mxu0 0
  %768 = vmatpush1.bf16.msra.mxu0 %v746
  %769 = vmatprep.subr.bf16.mxu0 0
  %770 = vmatpush1.bf16.msra.mxu0 %v745
  %771 = vmatprep.subr.bf16.mxu0 0
  %772 = vmatpush1.bf16.msra.mxu0 %v744
  %773 = vmatprep.subr.bf16.mxu0 0
  %774 = vmatpush1.bf16.msra.mxu0 %v743
  %775 = vmatprep.subr.bf16.mxu0 0
  %776 = vmatpush2.bf16.msra.mxu0 0
  %777 = vmatprep.subr.bf16.mxu0 0
  %778 = vmatpush2.bf16.msra.mxu0 0
  %779 = vmatprep.subr.bf16.mxu0 0
  %780 = vmatpush2.bf16.msra.mxu0 0
  %781 = vmatprep.subr.bf16.mxu0 0
  %782 = vmatpush2.bf16.msra.mxu0 0
  %783 = vmatprep.subr.bf16.mxu0 0
  %784 = vmatpush2.bf16.msra.mxu0 0
  %785 = vmatprep.subr.bf16.mxu0 0
  %786 = vmatpush2.bf16.msra.mxu0 0
  %787 = vmatprep.subr.bf16.mxu0 0
  %788 = vmatpush2.bf16.msra.mxu0 0
  %789 = vmatprep.subr.bf16.mxu0 0
  %790 = vmatpush2.bf16.msra.mxu0 0
  %791 = vmatprep.mubr.bf16.mxu0 0
  %792 = vmatmul.mubr.bf16.gmra.mxu0 %v693
  %v793 = vpop.f32.mrf.mxu0
  %v794 = vadd.f32 0.0, %v793
  %v795 = vpop.f32.mrf.mxu0
  %v796 = vpop.f32.mrf.mxu0
  %v797 = vadd.f32 0.0, %v796
  %v798 = vpop.f32.mrf.mxu0
  %799 = vdwg.mxu0
  %v800 = vadd.f32 %v633, %v794
  %v801 = vadd.f32 %v634, %v797
  %s802 = scalar_lea.vmem %s0, 64
  %v803 = vld [vmem:[%s802] sm:$0xff]
  %v804 = vld [vmem:[%s802 + $0x8] sm:$0xff]
  %v807 = vunpack.c.l.b16 %v803
  %v808 = vunpack.c.h.b16 %v803
  %v809 = vunpack.c.l.b16 %v804
  %v810 = vunpack.c.h.b16 %v804
  %v811 = vpack.c.b16 %v809, %v807
  %v812 = vpack.c.b16 %v810, %v808
  %v815 = vsel %vm150, %v812, 0
  %817 = vmatprep.subr.bf16.mxu0 0
  %818 = vmatpush1.bf16.msra.mxu0 %v133
  %819 = vmatprep.subr.bf16.mxu0 0
  %820 = vmatpush1.bf16.msra.mxu0 %v132
  %821 = vmatprep.subr.bf16.mxu0 0
  %822 = vmatpush1.bf16.msra.mxu0 %v131
  %823 = vmatprep.subr.bf16.mxu0 0
  %824 = vmatpush1.bf16.msra.mxu0 %v130
  %825 = vmatprep.subr.bf16.mxu0 0
  %826 = vmatpush1.bf16.msra.mxu0 %v129
  %827 = vmatprep.subr.bf16.mxu0 0
  %828 = vmatpush1.bf16.msra.mxu0 %v128
  %829 = vmatprep.subr.bf16.mxu0 0
  %830 = vmatpush1.bf16.msra.mxu0 %v127
  %831 = vmatprep.subr.bf16.mxu0 0
  %832 = vmatpush1.bf16.msra.mxu0 %v126
  %833 = vmatprep.subr.bf16.mxu0 0
  %834 = vmatpush2.bf16.msra.mxu0 0
  %835 = vmatprep.subr.bf16.mxu0 0
  %836 = vmatpush2.bf16.msra.mxu0 0
  %837 = vmatprep.subr.bf16.mxu0 0
  %838 = vmatpush2.bf16.msra.mxu0 0
  %839 = vmatprep.subr.bf16.mxu0 0
  %840 = vmatpush2.bf16.msra.mxu0 0
  %841 = vmatprep.subr.bf16.mxu0 0
  %842 = vmatpush2.bf16.msra.mxu0 %v137
  %843 = vmatprep.subr.bf16.mxu0 0
  %844 = vmatpush2.bf16.msra.mxu0 %v136
  %845 = vmatprep.subr.bf16.mxu0 0
  %846 = vmatpush2.bf16.msra.mxu0 %v135
  %847 = vmatprep.subr.bf16.mxu0 0
  %848 = vmatpush2.bf16.msra.mxu0 %v134
  %849 = vmatprep.mubr.bf16.mxu0 %v815
  %850 = vmatmul.mubr.bf16.gmra.mxu0 %v811
  %v851 = vpop.f32.mrf.mxu0
  %v852 = vadd.f32 %v62, %v851
  %v853 = vpop.f32.mrf.mxu0
  %v854 = vpop.f32.mrf.mxu0
  %v855 = vadd.f32 %v62, %v854
  %v856 = vpop.f32.mrf.mxu0
  %857 = vdwg.mxu0
  %v858 = vmax.f32 %v852, 0.0
  %v859 = vmax.f32 %v855, 0.0
  %v860 = vpack.c.bf16 %v859, %v858
  %s861 = scalar_lea.vmem %s3, 256
  %v862 = vld [vmem:[%s861] sm:$0xf]
  %v863 = vld [vmem:[%s861 + $0x4] sm:$0xf]
  %v864 = vld [vmem:[%s861 + $0x8] sm:$0xf]
  %v865 = vld [vmem:[%s861 + $0xc] sm:$0xf]
  %v866 = vld [vmem:[%s861 + $0x10] sm:$0xf]
  %v867 = vld [vmem:[%s861 + $0x14] sm:$0xf]
  %v868 = vld [vmem:[%s861 + $0x18] sm:$0xf]
  %v869 = vld [vmem:[%s861 + $0x1c] sm:$0xf]
  %v870 = vld [vmem:[%s861 + $0x20] sm:$0xf]
  %v871 = vld [vmem:[%s861 + $0x24] sm:$0xf]
  %v872 = vld [vmem:[%s861 + $0x28] sm:$0xf]
  %v873 = vld [vmem:[%s861 + $0x2c] sm:$0xf]
  %v874 = vld [vmem:[%s861 + $0x30] sm:$0xf]
  %v875 = vld [vmem:[%s861 + $0x34] sm:$0xf]
  %v876 = vld [vmem:[%s861 + $0x38] sm:$0xf]
  %v877 = vld [vmem:[%s861 + $0x3c] sm:$0xf]
  %v894 = vunpack.c.l.b16 %v862
  %v895 = vunpack.c.l.b16 %v863
  %v896 = vunpack.c.l.b16 %v864
  %v897 = vunpack.c.l.b16 %v865
  %v898 = vunpack.c.l.b16 %v866
  %v899 = vunpack.c.l.b16 %v867
  %v900 = vunpack.c.l.b16 %v868
  %v901 = vunpack.c.l.b16 %v869
  %v902 = vunpack.c.l.b16 %v870
  %v903 = vunpack.c.l.b16 %v871
  %v904 = vunpack.c.l.b16 %v872
  %v905 = vunpack.c.l.b16 %v873
  %v906 = vunpack.c.l.b16 %v874
  %v907 = vunpack.c.l.b16 %v875
  %v908 = vunpack.c.l.b16 %v876
  %v909 = vunpack.c.l.b16 %v877
  %v910 = vpack.c.b16 %v895, %v894
  %v911 = vpack.c.b16 %v897, %v896
  %v912 = vpack.c.b16 %v899, %v898
  %v913 = vpack.c.b16 %v901, %v900
  %v914 = vpack.c.b16 %v903, %v902
  %v915 = vpack.c.b16 %v905, %v904
  %v916 = vpack.c.b16 %v907, %v906
  %v917 = vpack.c.b16 %v909, %v908
  %926 = vmatprep.subr.bf16.mxu0 0
  %927 = vmatpush1.bf16.msra.mxu0 %v917
  %928 = vmatprep.subr.bf16.mxu0 0
  %929 = vmatpush1.bf16.msra.mxu0 %v916
  %930 = vmatprep.subr.bf16.mxu0 0
  %931 = vmatpush1.bf16.msra.mxu0 %v915
  %932 = vmatprep.subr.bf16.mxu0 0
  %933 = vmatpush1.bf16.msra.mxu0 %v914
  %934 = vmatprep.subr.bf16.mxu0 0
  %935 = vmatpush1.bf16.msra.mxu0 %v913
  %936 = vmatprep.subr.bf16.mxu0 0
  %937 = vmatpush1.bf16.msra.mxu0 %v912
  %938 = vmatprep.subr.bf16.mxu0 0
  %939 = vmatpush1.bf16.msra.mxu0 %v911
  %940 = vmatprep.subr.bf16.mxu0 0
  %941 = vmatpush1.bf16.msra.mxu0 %v910
  %942 = vmatprep.subr.bf16.mxu0 0
  %943 = vmatpush2.bf16.msra.mxu0 0
  %944 = vmatprep.subr.bf16.mxu0 0
  %945 = vmatpush2.bf16.msra.mxu0 0
  %946 = vmatprep.subr.bf16.mxu0 0
  %947 = vmatpush2.bf16.msra.mxu0 0
  %948 = vmatprep.subr.bf16.mxu0 0
  %949 = vmatpush2.bf16.msra.mxu0 0
  %950 = vmatprep.subr.bf16.mxu0 0
  %951 = vmatpush2.bf16.msra.mxu0 0
  %952 = vmatprep.subr.bf16.mxu0 0
  %953 = vmatpush2.bf16.msra.mxu0 0
  %954 = vmatprep.subr.bf16.mxu0 0
  %955 = vmatpush2.bf16.msra.mxu0 0
  %956 = vmatprep.subr.bf16.mxu0 0
  %957 = vmatpush2.bf16.msra.mxu0 0
  %958 = vmatprep.mubr.bf16.mxu0 0
  %959 = vmatmul.mubr.bf16.gmra.mxu0 %v860
  %v960 = vpop.f32.mrf.mxu0
  %v961 = vadd.f32 0.0, %v960
  %v962 = vpop.f32.mrf.mxu0
  %v963 = vpop.f32.mrf.mxu0
  %v964 = vadd.f32 0.0, %v963
  %v965 = vpop.f32.mrf.mxu0
  %966 = vdwg.mxu0
  %v967 = vadd.f32 %v800, %v961
  %v968 = vadd.f32 %v801, %v964
  %s969 = scalar_lea.vmem %s0, 80
  %v970 = vld [vmem:[%s969] sm:$0xff]
  %v971 = vld [vmem:[%s969 + $0x8] sm:$0xff]
  %v974 = vunpack.c.l.b16 %v970
  %v975 = vunpack.c.h.b16 %v970
  %v976 = vunpack.c.l.b16 %v971
  %v977 = vunpack.c.h.b16 %v971
  %v978 = vpack.c.b16 %v976, %v974
  %v979 = vpack.c.b16 %v977, %v975
  %v982 = vsel %vm150, %v979, 0
  %984 = vmatprep.subr.bf16.mxu0 0
  %985 = vmatpush1.bf16.msra.mxu0 %v133
  %986 = vmatprep.subr.bf16.mxu0 0
  %987 = vmatpush1.bf16.msra.mxu0 %v132
  %988 = vmatprep.subr.bf16.mxu0 0
  %989 = vmatpush1.bf16.msra.mxu0 %v131
  %990 = vmatprep.subr.bf16.mxu0 0
  %991 = vmatpush1.bf16.msra.mxu0 %v130
  %992 = vmatprep.subr.bf16.mxu0 0
  %993 = vmatpush1.bf16.msra.mxu0 %v129
  %994 = vmatprep.subr.bf16.mxu0 0
  %995 = vmatpush1.bf16.msra.mxu0 %v128
  %996 = vmatprep.subr.bf16.mxu0 0
  %997 = vmatpush1.bf16.msra.mxu0 %v127
  %998 = vmatprep.subr.bf16.mxu0 0
  %999 = vmatpush1.bf16.msra.mxu0 %v126
  %1000 = vmatprep.subr.bf16.mxu0 0
  %1001 = vmatpush2.bf16.msra.mxu0 0
  %1002 = vmatprep.subr.bf16.mxu0 0
  %1003 = vmatpush2.bf16.msra.mxu0 0
  %1004 = vmatprep.subr.bf16.mxu0 0
  %1005 = vmatpush2.bf16.msra.mxu0 0
  %1006 = vmatprep.subr.bf16.mxu0 0
  %1007 = vmatpush2.bf16.msra.mxu0 0
  %1008 = vmatprep.subr.bf16.mxu0 0
  %1009 = vmatpush2.bf16.msra.mxu0 %v137
  %1010 = vmatprep.subr.bf16.mxu0 0
  %1011 = vmatpush2.bf16.msra.mxu0 %v136
  %1012 = vmatprep.subr.bf16.mxu0 0
  %1013 = vmatpush2.bf16.msra.mxu0 %v135
  %1014 = vmatprep.subr.bf16.mxu0 0
  %1015 = vmatpush2.bf16.msra.mxu0 %v134
  %1016 = vmatprep.mubr.bf16.mxu0 %v982
  %1017 = vmatmul.mubr.bf16.gmra.mxu0 %v978
  %v1018 = vpop.f32.mrf.mxu0
  %v1019 = vadd.f32 %v62, %v1018
  %v1020 = vpop.f32.mrf.mxu0
  %v1021 = vpop.f32.mrf.mxu0
  %v1022 = vadd.f32 %v62, %v1021
  %v1023 = vpop.f32.mrf.mxu0
  %1024 = vdwg.mxu0
  %v1025 = vmax.f32 %v1019, 0.0
  %v1026 = vmax.f32 %v1022, 0.0
  %v1027 = vpack.c.bf16 %v1026, %v1025
  %s1028 = scalar_lea.vmem %s3, 320
  %v1029 = vld [vmem:[%s1028] sm:$0xf]
  %v1030 = vld [vmem:[%s1028 + $0x4] sm:$0xf]
  %v1031 = vld [vmem:[%s1028 + $0x8] sm:$0xf]
  %v1032 = vld [vmem:[%s1028 + $0xc] sm:$0xf]
  %v1033 = vld [vmem:[%s1028 + $0x10] sm:$0xf]
  %v1034 = vld [vmem:[%s1028 + $0x14] sm:$0xf]
  %v1035 = vld [vmem:[%s1028 + $0x18] sm:$0xf]
  %v1036 = vld [vmem:[%s1028 + $0x1c] sm:$0xf]
  %v1037 = vld [vmem:[%s1028 + $0x20] sm:$0xf]
  %v1038 = vld [vmem:[%s1028 + $0x24] sm:$0xf]
  %v1039 = vld [vmem:[%s1028 + $0x28] sm:$0xf]
  %v1040 = vld [vmem:[%s1028 + $0x2c] sm:$0xf]
  %v1041 = vld [vmem:[%s1028 + $0x30] sm:$0xf]
  %v1042 = vld [vmem:[%s1028 + $0x34] sm:$0xf]
  %v1043 = vld [vmem:[%s1028 + $0x38] sm:$0xf]
  %v1044 = vld [vmem:[%s1028 + $0x3c] sm:$0xf]
  %v1061 = vunpack.c.l.b16 %v1029
  %v1062 = vunpack.c.l.b16 %v1030
  %v1063 = vunpack.c.l.b16 %v1031
  %v1064 = vunpack.c.l.b16 %v1032
  %v1065 = vunpack.c.l.b16 %v1033
  %v1066 = vunpack.c.l.b16 %v1034
  %v1067 = vunpack.c.l.b16 %v1035
  %v1068 = vunpack.c.l.b16 %v1036
  %v1069 = vunpack.c.l.b16 %v1037
  %v1070 = vunpack.c.l.b16 %v1038
  %v1071 = vunpack.c.l.b16 %v1039
  %v1072 = vunpack.c.l.b16 %v1040
  %v1073 = vunpack.c.l.b16 %v1041
  %v1074 = vunpack.c.l.b16 %v1042
  %v1075 = vunpack.c.l.b16 %v1043
  %v1076 = vunpack.c.l.b16 %v1044
  %v1077 = vpack.c.b16 %v1062, %v1061
  %v1078 = vpack.c.b16 %v1064, %v1063
  %v1079 = vpack.c.b16 %v1066, %v1065
  %v1080 = vpack.c.b16 %v1068, %v1067
  %v1081 = vpack.c.b16 %v1070, %v1069
  %v1082 = vpack.c.b16 %v1072, %v1071
  %v1083 = vpack.c.b16 %v1074, %v1073
  %v1084 = vpack.c.b16 %v1076, %v1075
  %1093 = vmatprep.subr.bf16.mxu0 0
  %1094 = vmatpush1.bf16.msra.mxu0 %v1084
  %1095 = vmatprep.subr.bf16.mxu0 0
  %1096 = vmatpush1.bf16.msra.mxu0 %v1083
  %1097 = vmatprep.subr.bf16.mxu0 0
  %1098 = vmatpush1.bf16.msra.mxu0 %v1082
  %1099 = vmatprep.subr.bf16.mxu0 0
  %1100 = vmatpush1.bf16.msra.mxu0 %v1081
  %1101 = vmatprep.subr.bf16.mxu0 0
  %1102 = vmatpush1.bf16.msra.mxu0 %v1080
  %1103 = vmatprep.subr.bf16.mxu0 0
  %1104 = vmatpush1.bf16.msra.mxu0 %v1079
  %1105 = vmatprep.subr.bf16.mxu0 0
  %1106 = vmatpush1.bf16.msra.mxu0 %v1078
  %1107 = vmatprep.subr.bf16.mxu0 0
  %1108 = vmatpush1.bf16.msra.mxu0 %v1077
  %1109 = vmatprep.subr.bf16.mxu0 0
  %1110 = vmatpush2.bf16.msra.mxu0 0
  %1111 = vmatprep.subr.bf16.mxu0 0
  %1112 = vmatpush2.bf16.msra.mxu0 0
  %1113 = vmatprep.subr.bf16.mxu0 0
  %1114 = vmatpush2.bf16.msra.mxu0 0
  %1115 = vmatprep.subr.bf16.mxu0 0
  %1116 = vmatpush2.bf16.msra.mxu0 0
  %1117 = vmatprep.subr.bf16.mxu0 0
  %1118 = vmatpush2.bf16.msra.mxu0 0
  %1119 = vmatprep.subr.bf16.mxu0 0
  %1120 = vmatpush2.bf16.msra.mxu0 0
  %1121 = vmatprep.subr.bf16.mxu0 0
  %1122 = vmatpush2.bf16.msra.mxu0 0
  %1123 = vmatprep.subr.bf16.mxu0 0
  %1124 = vmatpush2.bf16.msra.mxu0 0
  %1125 = vmatprep.mubr.bf16.mxu0 0
  %1126 = vmatmul.mubr.bf16.gmra.mxu0 %v1027
  %v1127 = vpop.f32.mrf.mxu0
  %v1128 = vadd.f32 0.0, %v1127
  %v1129 = vpop.f32.mrf.mxu0
  %v1130 = vpop.f32.mrf.mxu0
  %v1131 = vadd.f32 0.0, %v1130
  %v1132 = vpop.f32.mrf.mxu0
  %1133 = vdwg.mxu0
  %v1134 = vadd.f32 %v967, %v1128
  %v1135 = vadd.f32 %v968, %v1131
  %s1136 = scalar_lea.vmem %s0, 96
  %v1137 = vld [vmem:[%s1136] sm:$0xff]
  %v1138 = vld [vmem:[%s1136 + $0x8] sm:$0xff]
  %v1141 = vunpack.c.l.b16 %v1137
  %v1142 = vunpack.c.h.b16 %v1137
  %v1143 = vunpack.c.l.b16 %v1138
  %v1144 = vunpack.c.h.b16 %v1138
  %v1145 = vpack.c.b16 %v1143, %v1141
  %v1146 = vpack.c.b16 %v1144, %v1142
  %v1149 = vsel %vm150, %v1146, 0
  %1151 = vmatprep.subr.bf16.mxu0 0
  %1152 = vmatpush1.bf16.msra.mxu0 %v133
  %1153 = vmatprep.subr.bf16.mxu0 0
  %1154 = vmatpush1.bf16.msra.mxu0 %v132
  %1155 = vmatprep.subr.bf16.mxu0 0
  %1156 = vmatpush1.bf16.msra.mxu0 %v131
  %1157 = vmatprep.subr.bf16.mxu0 0
  %1158 = vmatpush1.bf16.msra.mxu0 %v130
  %1159 = vmatprep.subr.bf16.mxu0 0
  %1160 = vmatpush1.bf16.msra.mxu0 %v129
  %1161 = vmatprep.subr.bf16.mxu0 0
  %1162 = vmatpush1.bf16.msra.mxu0 %v128
  %1163 = vmatprep.subr.bf16.mxu0 0
  %1164 = vmatpush1.bf16.msra.mxu0 %v127
  %1165 = vmatprep.subr.bf16.mxu0 0
  %1166 = vmatpush1.bf16.msra.mxu0 %v126
  %1167 = vmatprep.subr.bf16.mxu0 0
  %1168 = vmatpush2.bf16.msra.mxu0 0
  %1169 = vmatprep.subr.bf16.mxu0 0
  %1170 = vmatpush2.bf16.msra.mxu0 0
  %1171 = vmatprep.subr.bf16.mxu0 0
  %1172 = vmatpush2.bf16.msra.mxu0 0
  %1173 = vmatprep.subr.bf16.mxu0 0
  %1174 = vmatpush2.bf16.msra.mxu0 0
  %1175 = vmatprep.subr.bf16.mxu0 0
  %1176 = vmatpush2.bf16.msra.mxu0 %v137
  %1177 = vmatprep.subr.bf16.mxu0 0
  %1178 = vmatpush2.bf16.msra.mxu0 %v136
  %1179 = vmatprep.subr.bf16.mxu0 0
  %1180 = vmatpush2.bf16.msra.mxu0 %v135
  %1181 = vmatprep.subr.bf16.mxu0 0
  %1182 = vmatpush2.bf16.msra.mxu0 %v134
  %1183 = vmatprep.mubr.bf16.mxu0 %v1149
  %1184 = vmatmul.mubr.bf16.gmra.mxu0 %v1145
  %v1185 = vpop.f32.mrf.mxu0
  %v1186 = vadd.f32 %v62, %v1185
  %v1187 = vpop.f32.mrf.mxu0
  %v1188 = vpop.f32.mrf.mxu0
  %v1189 = vadd.f32 %v62, %v1188
  %v1190 = vpop.f32.mrf.mxu0
  %1191 = vdwg.mxu0
  %v1192 = vmax.f32 %v1186, 0.0
  %v1193 = vmax.f32 %v1189, 0.0
  %v1194 = vpack.c.bf16 %v1193, %v1192
  %s1195 = scalar_lea.vmem %s3, 384
  %v1196 = vld [vmem:[%s1195] sm:$0xf]
  %v1197 = vld [vmem:[%s1195 + $0x4] sm:$0xf]
  %v1198 = vld [vmem:[%s1195 + $0x8] sm:$0xf]
  %v1199 = vld [vmem:[%s1195 + $0xc] sm:$0xf]
  %v1200 = vld [vmem:[%s1195 + $0x10] sm:$0xf]
  %v1201 = vld [vmem:[%s1195 + $0x14] sm:$0xf]
  %v1202 = vld [vmem:[%s1195 + $0x18] sm:$0xf]
  %v1203 = vld [vmem:[%s1195 + $0x1c] sm:$0xf]
  %v1204 = vld [vmem:[%s1195 + $0x20] sm:$0xf]
  %v1205 = vld [vmem:[%s1195 + $0x24] sm:$0xf]
  %v1206 = vld [vmem:[%s1195 + $0x28] sm:$0xf]
  %v1207 = vld [vmem:[%s1195 + $0x2c] sm:$0xf]
  %v1208 = vld [vmem:[%s1195 + $0x30] sm:$0xf]
  %v1209 = vld [vmem:[%s1195 + $0x34] sm:$0xf]
  %v1210 = vld [vmem:[%s1195 + $0x38] sm:$0xf]
  %v1211 = vld [vmem:[%s1195 + $0x3c] sm:$0xf]
  %v1228 = vunpack.c.l.b16 %v1196
  %v1229 = vunpack.c.l.b16 %v1197
  %v1230 = vunpack.c.l.b16 %v1198
  %v1231 = vunpack.c.l.b16 %v1199
  %v1232 = vunpack.c.l.b16 %v1200
  %v1233 = vunpack.c.l.b16 %v1201
  %v1234 = vunpack.c.l.b16 %v1202
  %v1235 = vunpack.c.l.b16 %v1203
  %v1236 = vunpack.c.l.b16 %v1204
  %v1237 = vunpack.c.l.b16 %v1205
  %v1238 = vunpack.c.l.b16 %v1206
  %v1239 = vunpack.c.l.b16 %v1207
  %v1240 = vunpack.c.l.b16 %v1208
  %v1241 = vunpack.c.l.b16 %v1209
  %v1242 = vunpack.c.l.b16 %v1210
  %v1243 = vunpack.c.l.b16 %v1211
  %v1244 = vpack.c.b16 %v1229, %v1228
  %v1245 = vpack.c.b16 %v1231, %v1230
  %v1246 = vpack.c.b16 %v1233, %v1232
  %v1247 = vpack.c.b16 %v1235, %v1234
  %v1248 = vpack.c.b16 %v1237, %v1236
  %v1249 = vpack.c.b16 %v1239, %v1238
  %v1250 = vpack.c.b16 %v1241, %v1240
  %v1251 = vpack.c.b16 %v1243, %v1242
  %1260 = vmatprep.subr.bf16.mxu0 0
  %1261 = vmatpush1.bf16.msra.mxu0 %v1251
  %1262 = vmatprep.subr.bf16.mxu0 0
  %1263 = vmatpush1.bf16.msra.mxu0 %v1250
  %1264 = vmatprep.subr.bf16.mxu0 0
  %1265 = vmatpush1.bf16.msra.mxu0 %v1249
  %1266 = vmatprep.subr.bf16.mxu0 0
  %1267 = vmatpush1.bf16.msra.mxu0 %v1248
  %1268 = vmatprep.subr.bf16.mxu0 0
  %1269 = vmatpush1.bf16.msra.mxu0 %v1247
  %1270 = vmatprep.subr.bf16.mxu0 0
  %1271 = vmatpush1.bf16.msra.mxu0 %v1246
  %1272 = vmatprep.subr.bf16.mxu0 0
  %1273 = vmatpush1.bf16.msra.mxu0 %v1245
  %1274 = vmatprep.subr.bf16.mxu0 0
  %1275 = vmatpush1.bf16.msra.mxu0 %v1244
  %1276 = vmatprep.subr.bf16.mxu0 0
  %1277 = vmatpush2.bf16.msra.mxu0 0
  %1278 = vmatprep.subr.bf16.mxu0 0
  %1279 = vmatpush2.bf16.msra.mxu0 0
  %1280 = vmatprep.subr.bf16.mxu0 0
  %1281 = vmatpush2.bf16.msra.mxu0 0
  %1282 = vmatprep.subr.bf16.mxu0 0
  %1283 = vmatpush2.bf16.msra.mxu0 0
  %1284 = vmatprep.subr.bf16.mxu0 0
  %1285 = vmatpush2.bf16.msra.mxu0 0
  %1286 = vmatprep.subr.bf16.mxu0 0
  %1287 = vmatpush2.bf16.msra.mxu0 0
  %1288 = vmatprep.subr.bf16.mxu0 0
  %1289 = vmatpush2.bf16.msra.mxu0 0
  %1290 = vmatprep.subr.bf16.mxu0 0
  %1291 = vmatpush2.bf16.msra.mxu0 0
  %1292 = vmatprep.mubr.bf16.mxu0 0
  %1293 = vmatmul.mubr.bf16.gmra.mxu0 %v1194
  %v1294 = vpop.f32.mrf.mxu0
  %v1295 = vadd.f32 0.0, %v1294
  %v1296 = vpop.f32.mrf.mxu0
  %v1297 = vpop.f32.mrf.mxu0
  %v1298 = vadd.f32 0.0, %v1297
  %v1299 = vpop.f32.mrf.mxu0
  %1300 = vdwg.mxu0
  %v1301 = vadd.f32 %v1134, %v1295
  %v1302 = vadd.f32 %v1135, %v1298
  %s1303 = scalar_lea.vmem %s0, 112
  %v1304 = vld [vmem:[%s1303] sm:$0xff]
  %v1305 = vld [vmem:[%s1303 + $0x8] sm:$0xff]
  %v1308 = vunpack.c.l.b16 %v1304
  %v1309 = vunpack.c.h.b16 %v1304
  %v1310 = vunpack.c.l.b16 %v1305
  %v1311 = vunpack.c.h.b16 %v1305
  %v1312 = vpack.c.b16 %v1310, %v1308
  %v1313 = vpack.c.b16 %v1311, %v1309
  %v1316 = vsel %vm150, %v1313, 0
  %1318 = vmatprep.subr.bf16.mxu0 0
  %1319 = vmatpush1.bf16.msra.mxu0 %v133
  %1320 = vmatprep.subr.bf16.mxu0 0
  %1321 = vmatpush1.bf16.msra.mxu0 %v132
  %1322 = vmatprep.subr.bf16.mxu0 0
  %1323 = vmatpush1.bf16.msra.mxu0 %v131
  %1324 = vmatprep.subr.bf16.mxu0 0
  %1325 = vmatpush1.bf16.msra.mxu0 %v130
  %1326 = vmatprep.subr.bf16.mxu0 0
  %1327 = vmatpush1.bf16.msra.mxu0 %v129
  %1328 = vmatprep.subr.bf16.mxu0 0
  %1329 = vmatpush1.bf16.msra.mxu0 %v128
  %1330 = vmatprep.subr.bf16.mxu0 0
  %1331 = vmatpush1.bf16.msra.mxu0 %v127
  %1332 = vmatprep.subr.bf16.mxu0 0
  %1333 = vmatpush1.bf16.msra.mxu0 %v126
  %1334 = vmatprep.subr.bf16.mxu0 0
  %1335 = vmatpush2.bf16.msra.mxu0 0
  %1336 = vmatprep.subr.bf16.mxu0 0
  %1337 = vmatpush2.bf16.msra.mxu0 0
  %1338 = vmatprep.subr.bf16.mxu0 0
  %1339 = vmatpush2.bf16.msra.mxu0 0
  %1340 = vmatprep.subr.bf16.mxu0 0
  %1341 = vmatpush2.bf16.msra.mxu0 0
  %1342 = vmatprep.subr.bf16.mxu0 0
  %1343 = vmatpush2.bf16.msra.mxu0 %v137
  %1344 = vmatprep.subr.bf16.mxu0 0
  %1345 = vmatpush2.bf16.msra.mxu0 %v136
  %1346 = vmatprep.subr.bf16.mxu0 0
  %1347 = vmatpush2.bf16.msra.mxu0 %v135
  %1348 = vmatprep.subr.bf16.mxu0 0
  %1349 = vmatpush2.bf16.msra.mxu0 %v134
  %1350 = vmatprep.mubr.bf16.mxu0 %v1316
  %1351 = vmatmul.mubr.bf16.gmra.mxu0 %v1312
  %v1352 = vpop.f32.mrf.mxu0
  %v1353 = vadd.f32 %v62, %v1352
  %v1354 = vpop.f32.mrf.mxu0
  %v1355 = vpop.f32.mrf.mxu0
  %v1356 = vadd.f32 %v62, %v1355
  %v1357 = vpop.f32.mrf.mxu0
  %1358 = vdwg.mxu0
  %v1359 = vmax.f32 %v1353, 0.0
  %v1360 = vmax.f32 %v1356, 0.0
  %v1361 = vpack.c.bf16 %v1360, %v1359
  %s1362 = scalar_lea.vmem %s3, 448
  %v1363 = vld [vmem:[%s1362] sm:$0xf]
  %v1364 = vld [vmem:[%s1362 + $0x4] sm:$0xf]
  %v1365 = vld [vmem:[%s1362 + $0x8] sm:$0xf]
  %v1366 = vld [vmem:[%s1362 + $0xc] sm:$0xf]
  %v1367 = vld [vmem:[%s1362 + $0x10] sm:$0xf]
  %v1368 = vld [vmem:[%s1362 + $0x14] sm:$0xf]
  %v1369 = vld [vmem:[%s1362 + $0x18] sm:$0xf]
  %v1370 = vld [vmem:[%s1362 + $0x1c] sm:$0xf]
  %v1371 = vld [vmem:[%s1362 + $0x20] sm:$0xf]
  %v1372 = vld [vmem:[%s1362 + $0x24] sm:$0xf]
  %v1373 = vld [vmem:[%s1362 + $0x28] sm:$0xf]
  %v1374 = vld [vmem:[%s1362 + $0x2c] sm:$0xf]
  %v1375 = vld [vmem:[%s1362 + $0x30] sm:$0xf]
  %v1376 = vld [vmem:[%s1362 + $0x34] sm:$0xf]
  %v1377 = vld [vmem:[%s1362 + $0x38] sm:$0xf]
  %v1378 = vld [vmem:[%s1362 + $0x3c] sm:$0xf]
  %v1395 = vunpack.c.l.b16 %v1363
  %v1396 = vunpack.c.l.b16 %v1364
  %v1397 = vunpack.c.l.b16 %v1365
  %v1398 = vunpack.c.l.b16 %v1366
  %v1399 = vunpack.c.l.b16 %v1367
  %v1400 = vunpack.c.l.b16 %v1368
  %v1401 = vunpack.c.l.b16 %v1369
  %v1402 = vunpack.c.l.b16 %v1370
  %v1403 = vunpack.c.l.b16 %v1371
  %v1404 = vunpack.c.l.b16 %v1372
  %v1405 = vunpack.c.l.b16 %v1373
  %v1406 = vunpack.c.l.b16 %v1374
  %v1407 = vunpack.c.l.b16 %v1375
  %v1408 = vunpack.c.l.b16 %v1376
  %v1409 = vunpack.c.l.b16 %v1377
  %v1410 = vunpack.c.l.b16 %v1378
  %v1411 = vpack.c.b16 %v1396, %v1395
  %v1412 = vpack.c.b16 %v1398, %v1397
  %v1413 = vpack.c.b16 %v1400, %v1399
  %v1414 = vpack.c.b16 %v1402, %v1401
  %v1415 = vpack.c.b16 %v1404, %v1403
  %v1416 = vpack.c.b16 %v1406, %v1405
  %v1417 = vpack.c.b16 %v1408, %v1407
  %v1418 = vpack.c.b16 %v1410, %v1409
  %1427 = vmatprep.subr.bf16.mxu0 0
  %1428 = vmatpush1.bf16.msra.mxu0 %v1418
  %1429 = vmatprep.subr.bf16.mxu0 0
  %1430 = vmatpush1.bf16.msra.mxu0 %v1417
  %1431 = vmatprep.subr.bf16.mxu0 0
  %1432 = vmatpush1.bf16.msra.mxu0 %v1416
  %1433 = vmatprep.subr.bf16.mxu0 0
  %1434 = vmatpush1.bf16.msra.mxu0 %v1415
  %1435 = vmatprep.subr.bf16.mxu0 0
  %1436 = vmatpush1.bf16.msra.mxu0 %v1414
  %1437 = vmatprep.subr.bf16.mxu0 0
  %1438 = vmatpush1.bf16.msra.mxu0 %v1413
  %1439 = vmatprep.subr.bf16.mxu0 0
  %1440 = vmatpush1.bf16.msra.mxu0 %v1412
  %1441 = vmatprep.subr.bf16.mxu0 0
  %1442 = vmatpush1.bf16.msra.mxu0 %v1411
  %1443 = vmatprep.subr.bf16.mxu0 0
  %1444 = vmatpush2.bf16.msra.mxu0 0
  %1445 = vmatprep.subr.bf16.mxu0 0
  %1446 = vmatpush2.bf16.msra.mxu0 0
  %1447 = vmatprep.subr.bf16.mxu0 0
  %1448 = vmatpush2.bf16.msra.mxu0 0
  %1449 = vmatprep.subr.bf16.mxu0 0
  %1450 = vmatpush2.bf16.msra.mxu0 0
  %1451 = vmatprep.subr.bf16.mxu0 0
  %1452 = vmatpush2.bf16.msra.mxu0 0
  %1453 = vmatprep.subr.bf16.mxu0 0
  %1454 = vmatpush2.bf16.msra.mxu0 0
  %1455 = vmatprep.subr.bf16.mxu0 0
  %1456 = vmatpush2.bf16.msra.mxu0 0
  %1457 = vmatprep.subr.bf16.mxu0 0
  %1458 = vmatpush2.bf16.msra.mxu0 0
  %1459 = vmatprep.mubr.bf16.mxu0 0
  %1460 = vmatmul.mubr.bf16.gmra.mxu0 %v1361
  %v1461 = vpop.f32.mrf.mxu0
  %v1462 = vadd.f32 0.0, %v1461
  %v1463 = vpop.f32.mrf.mxu0
  %v1464 = vpop.f32.mrf.mxu0
  %v1465 = vadd.f32 0.0, %v1464
  %v1466 = vpop.f32.mrf.mxu0
  %1467 = vdwg.mxu0
  %v1468 = vadd.f32 %v1301, %v1462
  %v1469 = vadd.f32 %v1302, %v1465
  %s1470 = scalar_lea.vmem %s0, 128
  %v1471 = vld [vmem:[%s1470] sm:$0xff]
  %v1472 = vld [vmem:[%s1470 + $0x8] sm:$0xff]
  %v1475 = vunpack.c.l.b16 %v1471
  %v1476 = vunpack.c.h.b16 %v1471
  %v1477 = vunpack.c.l.b16 %v1472
  %v1478 = vunpack.c.h.b16 %v1472
  %v1479 = vpack.c.b16 %v1477, %v1475
  %v1480 = vpack.c.b16 %v1478, %v1476
  %v1483 = vsel %vm150, %v1480, 0
  %1485 = vmatprep.subr.bf16.mxu0 0
  %1486 = vmatpush1.bf16.msra.mxu0 %v133
  %1487 = vmatprep.subr.bf16.mxu0 0
  %1488 = vmatpush1.bf16.msra.mxu0 %v132
  %1489 = vmatprep.subr.bf16.mxu0 0
  %1490 = vmatpush1.bf16.msra.mxu0 %v131
  %1491 = vmatprep.subr.bf16.mxu0 0
  %1492 = vmatpush1.bf16.msra.mxu0 %v130
  %1493 = vmatprep.subr.bf16.mxu0 0
  %1494 = vmatpush1.bf16.msra.mxu0 %v129
  %1495 = vmatprep.subr.bf16.mxu0 0
  %1496 = vmatpush1.bf16.msra.mxu0 %v128
  %1497 = vmatprep.subr.bf16.mxu0 0
  %1498 = vmatpush1.bf16.msra.mxu0 %v127
  %1499 = vmatprep.subr.bf16.mxu0 0
  %1500 = vmatpush1.bf16.msra.mxu0 %v126
  %1501 = vmatprep.subr.bf16.mxu0 0
  %1502 = vmatpush2.bf16.msra.mxu0 0
  %1503 = vmatprep.subr.bf16.mxu0 0
  %1504 = vmatpush2.bf16.msra.mxu0 0
  %1505 = vmatprep.subr.bf16.mxu0 0
  %1506 = vmatpush2.bf16.msra.mxu0 0
  %1507 = vmatprep.subr.bf16.mxu0 0
  %1508 = vmatpush2.bf16.msra.mxu0 0
  %1509 = vmatprep.subr.bf16.mxu0 0
  %1510 = vmatpush2.bf16.msra.mxu0 %v137
  %1511 = vmatprep.subr.bf16.mxu0 0
  %1512 = vmatpush2.bf16.msra.mxu0 %v136
  %1513 = vmatprep.subr.bf16.mxu0 0
  %1514 = vmatpush2.bf16.msra.mxu0 %v135
  %1515 = vmatprep.subr.bf16.mxu0 0
  %1516 = vmatpush2.bf16.msra.mxu0 %v134
  %1517 = vmatprep.mubr.bf16.mxu0 %v1483
  %1518 = vmatmul.mubr.bf16.gmra.mxu0 %v1479
  %v1519 = vpop.f32.mrf.mxu0
  %v1520 = vadd.f32 %v62, %v1519
  %v1521 = vpop.f32.mrf.mxu0
  %v1522 = vpop.f32.mrf.mxu0
  %v1523 = vadd.f32 %v62, %v1522
  %v1524 = vpop.f32.mrf.mxu0
  %1525 = vdwg.mxu0
  %v1526 = vmax.f32 %v1520, 0.0
  %v1527 = vmax.f32 %v1523, 0.0
  %v1528 = vpack.c.bf16 %v1527, %v1526
  %s1529 = scalar_lea.vmem %s3, 512
  %v1530 = vld [vmem:[%s1529] sm:$0xf]
  %v1531 = vld [vmem:[%s1529 + $0x4] sm:$0xf]
  %v1532 = vld [vmem:[%s1529 + $0x8] sm:$0xf]
  %v1533 = vld [vmem:[%s1529 + $0xc] sm:$0xf]
  %v1534 = vld [vmem:[%s1529 + $0x10] sm:$0xf]
  %v1535 = vld [vmem:[%s1529 + $0x14] sm:$0xf]
  %v1536 = vld [vmem:[%s1529 + $0x18] sm:$0xf]
  %v1537 = vld [vmem:[%s1529 + $0x1c] sm:$0xf]
  %v1538 = vld [vmem:[%s1529 + $0x20] sm:$0xf]
  %v1539 = vld [vmem:[%s1529 + $0x24] sm:$0xf]
  %v1540 = vld [vmem:[%s1529 + $0x28] sm:$0xf]
  %v1541 = vld [vmem:[%s1529 + $0x2c] sm:$0xf]
  %v1542 = vld [vmem:[%s1529 + $0x30] sm:$0xf]
  %v1543 = vld [vmem:[%s1529 + $0x34] sm:$0xf]
  %v1544 = vld [vmem:[%s1529 + $0x38] sm:$0xf]
  %v1545 = vld [vmem:[%s1529 + $0x3c] sm:$0xf]
  %v1562 = vunpack.c.l.b16 %v1530
  %v1563 = vunpack.c.l.b16 %v1531
  %v1564 = vunpack.c.l.b16 %v1532
  %v1565 = vunpack.c.l.b16 %v1533
  %v1566 = vunpack.c.l.b16 %v1534
  %v1567 = vunpack.c.l.b16 %v1535
  %v1568 = vunpack.c.l.b16 %v1536
  %v1569 = vunpack.c.l.b16 %v1537
  %v1570 = vunpack.c.l.b16 %v1538
  %v1571 = vunpack.c.l.b16 %v1539
  %v1572 = vunpack.c.l.b16 %v1540
  %v1573 = vunpack.c.l.b16 %v1541
  %v1574 = vunpack.c.l.b16 %v1542
  %v1575 = vunpack.c.l.b16 %v1543
  %v1576 = vunpack.c.l.b16 %v1544
  %v1577 = vunpack.c.l.b16 %v1545
  %v1578 = vpack.c.b16 %v1563, %v1562
  %v1579 = vpack.c.b16 %v1565, %v1564
  %v1580 = vpack.c.b16 %v1567, %v1566
  %v1581 = vpack.c.b16 %v1569, %v1568
  %v1582 = vpack.c.b16 %v1571, %v1570
  %v1583 = vpack.c.b16 %v1573, %v1572
  %v1584 = vpack.c.b16 %v1575, %v1574
  %v1585 = vpack.c.b16 %v1577, %v1576
  %1594 = vmatprep.subr.bf16.mxu0 0
  %1595 = vmatpush1.bf16.msra.mxu0 %v1585
  %1596 = vmatprep.subr.bf16.mxu0 0
  %1597 = vmatpush1.bf16.msra.mxu0 %v1584
  %1598 = vmatprep.subr.bf16.mxu0 0
  %1599 = vmatpush1.bf16.msra.mxu0 %v1583
  %1600 = vmatprep.subr.bf16.mxu0 0
  %1601 = vmatpush1.bf16.msra.mxu0 %v1582
  %1602 = vmatprep.subr.bf16.mxu0 0
  %1603 = vmatpush1.bf16.msra.mxu0 %v1581
  %1604 = vmatprep.subr.bf16.mxu0 0
  %1605 = vmatpush1.bf16.msra.mxu0 %v1580
  %1606 = vmatprep.subr.bf16.mxu0 0
  %1607 = vmatpush1.bf16.msra.mxu0 %v1579
  %1608 = vmatprep.subr.bf16.mxu0 0
  %1609 = vmatpush1.bf16.msra.mxu0 %v1578
  %1610 = vmatprep.subr.bf16.mxu0 0
  %1611 = vmatpush2.bf16.msra.mxu0 0
  %1612 = vmatprep.subr.bf16.mxu0 0
  %1613 = vmatpush2.bf16.msra.mxu0 0
  %1614 = vmatprep.subr.bf16.mxu0 0
  %1615 = vmatpush2.bf16.msra.mxu0 0
  %1616 = vmatprep.subr.bf16.mxu0 0
  %1617 = vmatpush2.bf16.msra.mxu0 0
  %1618 = vmatprep.subr.bf16.mxu0 0
  %1619 = vmatpush2.bf16.msra.mxu0 0
  %1620 = vmatprep.subr.bf16.mxu0 0
  %1621 = vmatpush2.bf16.msra.mxu0 0
  %1622 = vmatprep.subr.bf16.mxu0 0
  %1623 = vmatpush2.bf16.msra.mxu0 0
  %1624 = vmatprep.subr.bf16.mxu0 0
  %1625 = vmatpush2.bf16.msra.mxu0 0
  %1626 = vmatprep.mubr.bf16.mxu0 0
  %1627 = vmatmul.mubr.bf16.gmra.mxu0 %v1528
  %v1628 = vpop.f32.mrf.mxu0
  %v1629 = vadd.f32 0.0, %v1628
  %v1630 = vpop.f32.mrf.mxu0
  %v1631 = vpop.f32.mrf.mxu0
  %v1632 = vadd.f32 0.0, %v1631
  %v1633 = vpop.f32.mrf.mxu0
  %1634 = vdwg.mxu0
  %v1635 = vadd.f32 %v1468, %v1629
  %v1636 = vadd.f32 %v1469, %v1632
  %v1638 = vlaneseq
  %v1639 = vshrl.u32 %v1638, 7
  %v1640 = vsub.s32 0, %v1639
  %v1641 = vrot.slane %v64, %v1640
  %v1643 = vadd.f32 %v1635, %v1641
  %v1644 = vadd.f32 %v1636, %v1641
  %v1645 = vmax.f32 %v1643, 0.0
  %v1646 = vmax.f32 %v1644, 0.0
  %v1647 = vpack.c.bf16 %v1646, %v1645
  %v1648 = vld [vmem:[%s5] sm:$0xf]
  %v1649 = vld [vmem:[%s5 + $0x4] sm:$0xf]
  %v1650 = vld [vmem:[%s5 + $0x8] sm:$0xf]
  %v1651 = vld [vmem:[%s5 + $0xc] sm:$0xf]
  %v1652 = vld [vmem:[%s5 + $0x10] sm:$0xf]
  %v1653 = vld [vmem:[%s5 + $0x14] sm:$0xf]
  %v1654 = vld [vmem:[%s5 + $0x18] sm:$0xf]
  %v1655 = vld [vmem:[%s5 + $0x1c] sm:$0xf]
  %v1656 = vld [vmem:[%s5 + $0x20] sm:$0xf]
  %v1657 = vld [vmem:[%s5 + $0x24] sm:$0xf]
  %v1658 = vld [vmem:[%s5 + $0x28] sm:$0xf]
  %v1659 = vld [vmem:[%s5 + $0x2c] sm:$0xf]
  %v1660 = vld [vmem:[%s5 + $0x30] sm:$0xf]
  %v1661 = vld [vmem:[%s5 + $0x34] sm:$0xf]
  %v1662 = vld [vmem:[%s5 + $0x38] sm:$0xf]
  %v1663 = vld [vmem:[%s5 + $0x3c] sm:$0xf]
  %v1665 = vlaneseq
  %v1666 = vshrl.u32 %v1665, 7
  %v1667 = vsub.s32 0, %v1666
  %v1668 = vrot.slane %v65, %v1667
  %v1686 = vunpack.c.l.b16 %v1648
  %v1687 = vunpack.c.l.b16 %v1649
  %v1688 = vunpack.c.l.b16 %v1650
  %v1689 = vunpack.c.l.b16 %v1651
  %v1690 = vunpack.c.l.b16 %v1652
  %v1691 = vunpack.c.l.b16 %v1653
  %v1692 = vunpack.c.l.b16 %v1654
  %v1693 = vunpack.c.l.b16 %v1655
  %v1694 = vunpack.c.l.b16 %v1656
  %v1695 = vunpack.c.l.b16 %v1657
  %v1696 = vunpack.c.l.b16 %v1658
  %v1697 = vunpack.c.l.b16 %v1659
  %v1698 = vunpack.c.l.b16 %v1660
  %v1699 = vunpack.c.l.b16 %v1661
  %v1700 = vunpack.c.l.b16 %v1662
  %v1701 = vunpack.c.l.b16 %v1663
  %v1702 = vpack.c.b16 %v1687, %v1686
  %v1703 = vpack.c.b16 %v1689, %v1688
  %v1704 = vpack.c.b16 %v1691, %v1690
  %v1705 = vpack.c.b16 %v1693, %v1692
  %v1706 = vpack.c.b16 %v1695, %v1694
  %v1707 = vpack.c.b16 %v1697, %v1696
  %v1708 = vpack.c.b16 %v1699, %v1698
  %v1709 = vpack.c.b16 %v1701, %v1700
  %1718 = vmatprep.subr.bf16.mxu0 0
  %1719 = vmatpush1.bf16.msra.mxu0 %v1709
  %1720 = vmatprep.subr.bf16.mxu0 0
  %1721 = vmatpush1.bf16.msra.mxu0 %v1708
  %1722 = vmatprep.subr.bf16.mxu0 0
  %1723 = vmatpush1.bf16.msra.mxu0 %v1707
  %1724 = vmatprep.subr.bf16.mxu0 0
  %1725 = vmatpush1.bf16.msra.mxu0 %v1706
  %1726 = vmatprep.subr.bf16.mxu0 0
  %1727 = vmatpush1.bf16.msra.mxu0 %v1705
  %1728 = vmatprep.subr.bf16.mxu0 0
  %1729 = vmatpush1.bf16.msra.mxu0 %v1704
  %1730 = vmatprep.subr.bf16.mxu0 0
  %1731 = vmatpush1.bf16.msra.mxu0 %v1703
  %1732 = vmatprep.subr.bf16.mxu0 0
  %1733 = vmatpush1.bf16.msra.mxu0 %v1702
  %1734 = vmatprep.subr.bf16.mxu0 0
  %1735 = vmatpush2.bf16.msra.mxu0 0
  %1736 = vmatprep.subr.bf16.mxu0 0
  %1737 = vmatpush2.bf16.msra.mxu0 0
  %1738 = vmatprep.subr.bf16.mxu0 0
  %1739 = vmatpush2.bf16.msra.mxu0 0
  %1740 = vmatprep.subr.bf16.mxu0 0
  %1741 = vmatpush2.bf16.msra.mxu0 0
  %1742 = vmatprep.subr.bf16.mxu0 0
  %1743 = vmatpush2.bf16.msra.mxu0 0
  %1744 = vmatprep.subr.bf16.mxu0 0
  %1745 = vmatpush2.bf16.msra.mxu0 0
  %1746 = vmatprep.subr.bf16.mxu0 0
  %1747 = vmatpush2.bf16.msra.mxu0 0
  %1748 = vmatprep.subr.bf16.mxu0 0
  %1749 = vmatpush2.bf16.msra.mxu0 0
  %1750 = vmatprep.mubr.bf16.mxu0 0
  %1751 = vmatmul.mubr.bf16.gmra.mxu0 %v1647
  %v1752 = vpop.f32.mrf.mxu0
  %v1753 = vadd.f32 %v1668, %v1752
  %v1754 = vpop.f32.mrf.mxu0
  %v1755 = vpop.f32.mrf.mxu0
  %v1756 = vadd.f32 %v1668, %v1755
  %v1757 = vpop.f32.mrf.mxu0
  %1758 = vdwg.mxu0
  %v1759 = vmax.f32 %v1753, 0.0
  %v1760 = vmax.f32 %v1756, 0.0
  %v1761 = vpack.c.bf16 %v1760, %v1759
  %v1762 = vld [vmem:[%s7] sm:$0xf]
  %v1763 = vld [vmem:[%s7 + $0x4] sm:$0xf]
  %v1764 = vld [vmem:[%s7 + $0x8] sm:$0xf]
  %v1765 = vld [vmem:[%s7 + $0xc] sm:$0xf]
  %v1766 = vld [vmem:[%s7 + $0x10] sm:$0xf]
  %v1767 = vld [vmem:[%s7 + $0x14] sm:$0xf]
  %v1768 = vld [vmem:[%s7 + $0x18] sm:$0xf]
  %v1769 = vld [vmem:[%s7 + $0x1c] sm:$0xf]
  %v1770 = vld [vmem:[%s7 + $0x20] sm:$0xf]
  %v1771 = vld [vmem:[%s7 + $0x24] sm:$0xf]
  %v1772 = vld [vmem:[%s7 + $0x28] sm:$0xf]
  %v1773 = vld [vmem:[%s7 + $0x2c] sm:$0xf]
  %v1774 = vld [vmem:[%s7 + $0x30] sm:$0xf]
  %v1775 = vld [vmem:[%s7 + $0x34] sm:$0xf]
  %v1776 = vld [vmem:[%s7 + $0x38] sm:$0xf]
  %v1777 = vld [vmem:[%s7 + $0x3c] sm:$0xf]
  %v1779 = vlaneseq
  %v1780 = vshrl.u32 %v1779, 7
  %v1781 = vsub.s32 0, %v1780
  %v1782 = vrot.slane %v66, %v1781
  %v1800 = vunpack.c.l.b16 %v1762
  %v1801 = vunpack.c.l.b16 %v1763
  %v1802 = vunpack.c.l.b16 %v1764
  %v1803 = vunpack.c.l.b16 %v1765
  %v1804 = vunpack.c.l.b16 %v1766
  %v1805 = vunpack.c.l.b16 %v1767
  %v1806 = vunpack.c.l.b16 %v1768
  %v1807 = vunpack.c.l.b16 %v1769
  %v1808 = vunpack.c.l.b16 %v1770
  %v1809 = vunpack.c.l.b16 %v1771
  %v1810 = vunpack.c.l.b16 %v1772
  %v1811 = vunpack.c.l.b16 %v1773
  %v1812 = vunpack.c.l.b16 %v1774
  %v1813 = vunpack.c.l.b16 %v1775
  %v1814 = vunpack.c.l.b16 %v1776
  %v1815 = vunpack.c.l.b16 %v1777
  %v1816 = vpack.c.b16 %v1801, %v1800
  %v1817 = vpack.c.b16 %v1803, %v1802
  %v1818 = vpack.c.b16 %v1805, %v1804
  %v1819 = vpack.c.b16 %v1807, %v1806
  %v1820 = vpack.c.b16 %v1809, %v1808
  %v1821 = vpack.c.b16 %v1811, %v1810
  %v1822 = vpack.c.b16 %v1813, %v1812
  %v1823 = vpack.c.b16 %v1815, %v1814
  %1832 = vmatprep.subr.bf16.mxu0 0
  %1833 = vmatpush1.bf16.msra.mxu0 %v1823
  %1834 = vmatprep.subr.bf16.mxu0 0
  %1835 = vmatpush1.bf16.msra.mxu0 %v1822
  %1836 = vmatprep.subr.bf16.mxu0 0
  %1837 = vmatpush1.bf16.msra.mxu0 %v1821
  %1838 = vmatprep.subr.bf16.mxu0 0
  %1839 = vmatpush1.bf16.msra.mxu0 %v1820
  %1840 = vmatprep.subr.bf16.mxu0 0
  %1841 = vmatpush1.bf16.msra.mxu0 %v1819
  %1842 = vmatprep.subr.bf16.mxu0 0
  %1843 = vmatpush1.bf16.msra.mxu0 %v1818
  %1844 = vmatprep.subr.bf16.mxu0 0
  %1845 = vmatpush1.bf16.msra.mxu0 %v1817
  %1846 = vmatprep.subr.bf16.mxu0 0
  %1847 = vmatpush1.bf16.msra.mxu0 %v1816
  %1848 = vmatprep.subr.bf16.mxu0 0
  %1849 = vmatpush2.bf16.msra.mxu0 0
  %1850 = vmatprep.subr.bf16.mxu0 0
  %1851 = vmatpush2.bf16.msra.mxu0 0
  %1852 = vmatprep.subr.bf16.mxu0 0
  %1853 = vmatpush2.bf16.msra.mxu0 0
  %1854 = vmatprep.subr.bf16.mxu0 0
  %1855 = vmatpush2.bf16.msra.mxu0 0
  %1856 = vmatprep.subr.bf16.mxu0 0
  %1857 = vmatpush2.bf16.msra.mxu0 0
  %1858 = vmatprep.subr.bf16.mxu0 0
  %1859 = vmatpush2.bf16.msra.mxu0 0
  %1860 = vmatprep.subr.bf16.mxu0 0
  %1861 = vmatpush2.bf16.msra.mxu0 0
  %1862 = vmatprep.subr.bf16.mxu0 0
  %1863 = vmatpush2.bf16.msra.mxu0 0
  %1864 = vmatprep.mubr.bf16.mxu0 0
  %1865 = vmatmul.mubr.bf16.gmra.mxu0 %v1761
  %v1866 = vpop.f32.mrf.mxu0
  %v1867 = vadd.f32 %v1782, %v1866
  %v1868 = vpop.f32.mrf.mxu0
  %v1869 = vpop.f32.mrf.mxu0
  %v1870 = vadd.f32 %v1782, %v1869
  %v1871 = vpop.f32.mrf.mxu0
  %1872 = vdwg.mxu0
  %1873 = vst [vmem:[%s9] sm:$0xff] %v1867
  %1874 = vst [vmem:[%s9 + $0x8] sm:$0xff] %v1870
  // Predicated region
  $region38: #{critic_forward.1} parent=0 // pred_check
    _
  $region39: #{critic_forward.1} parent=0 // pred_check_branch
    %1876 = sbr.rel (0) target = $region41
  $region40: #{critic_forward.1} parent=0 // pred_region
    _
  $region41: #{critic_forward.1} parent=0 // pred_fallthru
    _
  // Predicated region
  $region42: #{critic_forward.1} parent=0 // pred_check
    _
  $region43: #{critic_forward.1} parent=0 // pred_check_branch
    %1878 = sbr.rel (0) target = $region45
  $region44: #{critic_forward.1} parent=0 // pred_region
    _
  $region45: #{critic_forward.1} parent=0 // pred_fallthru
    _

</llo_original>
